<compile_context>
chip_gen: v7x
topology: tpu7x:2x2x1
jax: 0.10.0
libtpu: 0.0.40
codegen_flags: <defaults>
</compile_context>

<pallas_src>
import functools

import jax
import jax.numpy as jnp
from jax.experimental import pallas as pl
from jax.experimental.pallas import tpu as pltpu

C_IN = 1
C_MID = 8
C_OUT = 3

# tap order: dy-major, dx-minor (matches the weight packing below)
_OFFSETS = tuple((dy, dx) for dy in (-1, 0, 1) for dx in (-1, 0, 1))

# Images per grid step. At 16x16 / f32 this keeps patches-scratch + blocks +
# intermediates around ~12 MiB, safely inside v7x's 64 MiB VMEM (and trivially
# inside v5e/v6e's 128 MiB).
_BATCH_TILE_CAP = 128


# ---------------------------------------------------------------------------
# Fused Pallas kernel: whole forward for one batch tile (T images) per step
# ---------------------------------------------------------------------------
def _decode_net_kernel(x_ref, m_ref, w1_ref, b1_ref, w2_ref, b2_ref,
                       w3_ref, b3_ref, out_ref, patches_ref, *, W, c_mid):
    """x_ref   : (1, T*P)      lane-folded batch tile (Cin == 1), f32
       m_ref   : (9, T*P)      per-image halo-validity masks (0/1), f32
       w1_ref  : (C_MID, 9)    conv1 weights, f32
       w2_ref  : (C_MID, 72)   conv2 weights, bf16
       w3_ref  : (C_OUT, 72)   conv3 weights, bf16
       bN_ref  : (CoutN, 1)    biases, f32
       out_ref : (C_OUT, T*P)  lane-dense output slab, f32
       patches_ref: (72, T*P)  bf16 VMEM scratch for im2col patches
    """
    TP = x_ref.shape[-1]

    def taps(feat):
        """Yield (t, masked shifted feature) for the 9 conv taps of `feat`."""
        for t, (dy, dx) in enumerate(_OFFSETS):
            off = dy * W + dx
            if off == 0:
                yield t, feat                      # center tap: mask is all ones
            else:
                sh = pltpu.roll(feat, (-off) % TP, 1)      # sh[p] = feat[p + off]
                yield t, sh * m_ref[t:t + 1, :]            # zero invalid halo taps

    # ---- conv1 (Cin=1, K=9): VPU broadcast-MAC; an 8x9 matmul would waste the MXU
    x = x_ref[...]                                          # (1, TP) f32
    f1 = jnp.zeros((c_mid, TP), jnp.float32)
    for t, tap in taps(x):
        f1 = f1 + w1_ref[:, t:t + 1] * tap                  # (c_mid,1)*(1,TP)
    f1 = jnp.maximum(f1 + b1_ref[...], 0.0)                 # (c_mid, TP)

    # ---- conv2 / conv3: im2col into bf16 VMEM scratch, MXU matmul, f32 accumulation
    def im2col(feat):
        for t, tap in taps(feat):
            patches_ref[t * c_mid:(t + 1) * c_mid, :] = tap.astype(jnp.bfloat16)

    im2col(f1)
    f2 = jnp.dot(w2_ref[...], patches_ref[...],
                 preferred_element_type=jnp.float32)        # (c_mid, TP)
    f2 = jnp.maximum(f2 + b2_ref[...], 0.0)

    im2col(f2)
    f3 = jnp.dot(w3_ref[...], patches_ref[...],
                 preferred_element_type=jnp.float32)        # (C_OUT, TP)
    out_ref[...] = jnp.tanh(f3 + b3_ref[...])               # DecodeNetPro tail: tanh


# ---------------------------------------------------------------------------
# Wrapper
# ---------------------------------------------------------------------------
def _build_masks(H, W, T):
    """(9, T*H*W) 0/1 masks: tap (dy,dx) valid at (h,w) iff (h+dy,w+dx) is
    inside the SAME image. Tiled per image so the circular lane roll can never
    leak data across image boundaries."""
    p = jnp.arange(H * W, dtype=jnp.int32)
    h = p // W
    w = p % W
    rows = []
    for dy, dx in _OFFSETS:
        valid = (h + dy >= 0) & (h + dy < H) & (w + dx >= 0) & (w + dx < W)
        rows.append(valid.astype(jnp.float32))
    m = jnp.stack(rows, axis=0)            # (9, P)
    return jnp.tile(m, (1, T))             # (9, T*P)


@jax.jit
def decode_net_pro_forward(x_nchw, packed):
    """x_nchw: (B, 1, H, W) float32 (torch layout). Returns (B, 3, H, W)."""
    w1p, b1p, w2p, b2p, w3p, b3p = packed
    B, c_in, H, W = x_nchw.shape
    assert c_in == 1, "DecodeNetPro stand-in expects a single input channel"
    P = H * W
    c_mid = w1p.shape[0]
    c_out = w3p.shape[0]

    T = min(B, _BATCH_TILE_CAP)            # images per grid step
    nb = pl.cdiv(B, T)
    Bp = nb * T
    TP = T * P
    assert TP % 128 == 0 or nb == 1, "batch tile must be lane aligned"

    x2 = x_nchw.reshape(B, P).astype(jnp.float32)
    if Bp != B:                            # pad batch to a whole number of tiles
        x2 = jnp.concatenate([x2, jnp.zeros((Bp - B, P), jnp.float32)], axis=0)
    x_slab = x2.reshape(1, Bp * P)         # lane-folded slab (free reshape, Cin==1)

    masks = _build_masks(H, W, T)          # (9, T*P), constant-folded by XLA

    kernel = functools.partial(_decode_net_kernel, W=W, c_mid=c_mid)
    y_slab = pl.pallas_call(
        kernel,
        out_shape=jax.ShapeDtypeStruct((c_out, Bp * P), jnp.float32),
        grid=(nb,),
        in_specs=[
            pl.BlockSpec((1, TP), lambda i: (0, i)),       # image slab tile
            pl.BlockSpec((9, TP), lambda i: (0, 0)),       # halo masks (shared)
            pl.BlockSpec(w1p.shape, lambda i: (0, 0)),
            pl.BlockSpec(b1p.shape, lambda i: (0, 0)),
            pl.BlockSpec(w2p.shape, lambda i: (0, 0)),
            pl.BlockSpec(b2p.shape, lambda i: (0, 0)),
            pl.BlockSpec(w3p.shape, lambda i: (0, 0)),
            pl.BlockSpec(b3p.shape, lambda i: (0, 0)),
        ],
        out_specs=pl.BlockSpec((c_out, TP), lambda i: (0, i)),
        scratch_shapes=[pltpu.VMEM((9 * c_mid, TP), jnp.bfloat16)],   # im2col patches
        compiler_params=pltpu.CompilerParams(
            dimension_semantics=("parallel",),             # batch tiles -> both TCs on v7x
            vmem_limit_bytes=32 * 1024 * 1024),
    )(x_slab, masks, w1p, b1p, w2p, b2p, w3p, b3p)

    # Tiny (C, B) -> (B, C) transpose back to NCHW happens outside the kernel.
    y = y_slab.reshape(c_out, Bp, P)[:, :B]
    return jnp.transpose(y, (1, 0, 2)).reshape(B, c_out, H, W)


# ---------------------------------------------------------------------------
# Parameters (random stand-in, torch-style OIHW) and packing
# ---------------------------------------------------------------------------
def init_params(key, c_in=C_IN, c_mid=C_MID, c_out=C_OUT):
    ks = jax.random.split(key, 6)

    def conv_w(k, co, ci):
        return jax.random.normal(k, (co, ci, 3, 3), jnp.float32) / jnp.sqrt(9.0 * ci)

    return {
        "w1": conv_w(ks[0], c_mid, c_in),
        "b1": 0.2 * jax.random.normal(ks[1], (c_mid,), jnp.float32),
        "w2": conv_w(ks[2], c_mid, c_mid),
        "b2": 0.2 * jax.random.normal(ks[3], (c_mid,), jnp.float32),
        "w3": conv_w(ks[4], c_out, c_mid),
        "b3": 0.2 * jax.random.normal(ks[5], (c_out,), jnp.float32),
    }


def _pack_conv(w_oihw):
    """(Cout,Cin,3,3) -> (Cout, 9*Cin); columns ordered tap-major (dy,dx),
    channel-minor, matching the kernel's patch-row stacking."""
    c_o, c_i = w_oihw.shape[0], w_oihw.shape[1]
    return jnp.transpose(w_oihw, (0, 2, 3, 1)).reshape(c_o, 9 * c_i)


def pack_params(params):
    w1p = _pack_conv(params["w1"]).astype(jnp.float32)          # (8, 9)  VPU path
    w2p = _pack_conv(params["w2"]).astype(jnp.bfloat16)         # (8, 72) MXU path
    w3p = _pack_conv(params["w3"]).astype(jnp.bfloat16)         # (3, 72) MXU path
    b1p = params["b1"].reshape(-1, 1).astype(jnp.float32)
    b2p = params["b2"].reshape(-1, 1).astype(jnp.float32)
    b3p = params["b3"].reshape(-1, 1).astype(jnp.float32)
    return (w1p, b1p, w2p, b2p, w3p, b3p)


# ---------------------------------------------------------------------------
# Pure-JAX reference (same stand-in architecture) for a correctness check
# ---------------------------------------------------------------------------
def reference_forward(x, params):
    def conv(inp, w, b, relu):
        y = jax.lax.conv_general_dilated(
            inp, w, window_strides=(1, 1), padding="SAME",
            dimension_numbers=("NCHW", "OIHW", "NCHW"),
            precision=jax.lax.Precision.HIGHEST)
        y = y + b.reshape(1, -1, 1, 1)
        return jnp.maximum(y, 0.0) if relu else y

    f1 = conv(x, params["w1"], params["b1"], True)
    f2 = conv(f1, params["w2"], params["b2"], True)
    f3 = conv(f2, params["w3"], params["b3"], False)
    return jnp.tanh(f3)


if __name__ == "__main__":
    key = jax.random.PRNGKey(0)
    k_params, k_x = jax.random.split(key)
    params = init_params(k_params)
    packed = pack_params(params)

    # torch-equivalent input: NCHW, batch=2, 1 channel, 16x16 spatial
    x = jax.random.normal(k_x, (2, 1, 16, 16), jnp.float32)

    y = decode_net_pro_forward(x, packed)
    jax.block_until_ready(y)

    assert y.shape == (2, 3, 16, 16)
    assert bool(jnp.all(jnp.isfinite(y)))
    assert bool(jnp.all(jnp.abs(y) <= 1.0))          # tanh range

    ref = reference_forward(x, params)
    max_err = float(jnp.max(jnp.abs(y - ref)))
    mean_err = float(jnp.mean(jnp.abs(y - ref)))
    assert max_err < 1e-1 and mean_err < 1e-2, (max_err, mean_err)

    print("KERNEL_OK")
</pallas_src>

<mosaic_0001>
module attributes {stable_mosaic.version = 11 : i64} {
  func.func @_decode_net_kernel(%arg0: i32, %arg1: memref<1x512xf32, #tpu.memory_space<vmem>>, %arg2: memref<9x512xf32, #tpu.memory_space<vmem>>, %arg3: memref<8x9xf32, #tpu.memory_space<vmem>>, %arg4: memref<8x1xf32, #tpu.memory_space<vmem>>, %arg5: memref<8x72xbf16, #tpu.memory_space<vmem>>, %arg6: memref<8x1xf32, #tpu.memory_space<vmem>>, %arg7: memref<3x72xbf16, #tpu.memory_space<vmem>>, %arg8: memref<3x1xf32, #tpu.memory_space<vmem>>, %arg9: memref<3x512xf32, #tpu.memory_space<vmem>>, %arg10: memref<72x512xbf16, #tpu.memory_space<vmem>>) attributes {dimension_semantics = [#tpu.dimension_semantics<parallel>], iteration_bounds = array<i64: 1>, scalar_prefetch = 0 : i64, scratch_operands = 1 : i64, tpu.core_type = #tpu.core_type<tc>, window_params = [{transform_indices = @transform_0, window_bounds = array<i64: 1, 512>}, {pipeline_mode = #tpu.pipeline_mode<synchronous>, transform_indices = @transform_1, window_bounds = array<i64: 9, 512>}, {pipeline_mode = #tpu.pipeline_mode<synchronous>, transform_indices = @transform_2, window_bounds = array<i64: 8, 9>}, {pipeline_mode = #tpu.pipeline_mode<synchronous>, transform_indices = @transform_3, window_bounds = array<i64: 8, 1>}, {pipeline_mode = #tpu.pipeline_mode<synchronous>, transform_indices = @transform_4, window_bounds = array<i64: 8, 72>}, {pipeline_mode = #tpu.pipeline_mode<synchronous>, transform_indices = @transform_5, window_bounds = array<i64: 8, 1>}, {pipeline_mode = #tpu.pipeline_mode<synchronous>, transform_indices = @transform_6, window_bounds = array<i64: 3, 72>}, {pipeline_mode = #tpu.pipeline_mode<synchronous>, transform_indices = @transform_7, window_bounds = array<i64: 3, 1>}, {transform_indices = @transform_8, window_bounds = array<i64: 3, 512>}]} {
    %c0 = arith.constant 0 : index
    %c0_0 = arith.constant 0 : index
    %0 = vector.load %arg1[%c0, %c0_0] : memref<1x512xf32, #tpu.memory_space<vmem>>, vector<1x512xf32>
    %cst = arith.constant 0.000000e+00 : f32
    %1 = vector.broadcast %cst : f32 to vector<8x512xf32>
    %c17_i32 = arith.constant 17 : i32
    %2 = tpu.dynamic_rotate %0 by %c17_i32 dim 1 : vector<1x512xf32>, i32 -> vector<1x512xf32>
    %c0_1 = arith.constant 0 : index
    %c0_2 = arith.constant 0 : index
    %3 = vector.load %arg2[%c0_1, %c0_2] : memref<9x512xf32, #tpu.memory_space<vmem>>, vector<1x512xf32>
    %4 = arith.mulf %2, %3 : vector<1x512xf32>
    %c0_3 = arith.constant 0 : index
    %c0_4 = arith.constant 0 : index
    %5 = vector.load %arg3[%c0_3, %c0_4] : memref<8x9xf32, #tpu.memory_space<vmem>>, vector<8x1xf32>
    %6 = vector.broadcast %5 : vector<8x1xf32> to vector<8x512xf32>
    %7 = vector.broadcast %4 : vector<1x512xf32> to vector<8x512xf32>
    %8 = arith.mulf %6, %7 : vector<8x512xf32>
    %9 = arith.addf %1, %8 : vector<8x512xf32>
    %c16_i32 = arith.constant 16 : i32
    %10 = tpu.dynamic_rotate %0 by %c16_i32 dim 1 : vector<1x512xf32>, i32 -> vector<1x512xf32>
    %c1 = arith.constant 1 : index
    %c0_5 = arith.constant 0 : index
    %11 = vector.load %arg2[%c1, %c0_5] : memref<9x512xf32, #tpu.memory_space<vmem>>, vector<1x512xf32>
    %12 = arith.mulf %10, %11 : vector<1x512xf32>
    %c0_6 = arith.constant 0 : index
    %c1_7 = arith.constant 1 : index
    %13 = vector.load %arg3[%c0_6, %c1_7] : memref<8x9xf32, #tpu.memory_space<vmem>>, vector<8x1xf32>
    %14 = vector.broadcast %13 : vector<8x1xf32> to vector<8x512xf32>
    %15 = vector.broadcast %12 : vector<1x512xf32> to vector<8x512xf32>
    %16 = arith.mulf %14, %15 : vector<8x512xf32>
    %17 = arith.addf %9, %16 : vector<8x512xf32>
    %c15_i32 = arith.constant 15 : i32
    %18 = tpu.dynamic_rotate %0 by %c15_i32 dim 1 : vector<1x512xf32>, i32 -> vector<1x512xf32>
    %c2 = arith.constant 2 : index
    %c0_8 = arith.constant 0 : index
    %19 = vector.load %arg2[%c2, %c0_8] : memref<9x512xf32, #tpu.memory_space<vmem>>, vector<1x512xf32>
    %20 = arith.mulf %18, %19 : vector<1x512xf32>
    %c0_9 = arith.constant 0 : index
    %c2_10 = arith.constant 2 : index
    %21 = vector.load %arg3[%c0_9, %c2_10] : memref<8x9xf32, #tpu.memory_space<vmem>>, vector<8x1xf32>
    %22 = vector.broadcast %21 : vector<8x1xf32> to vector<8x512xf32>
    %23 = vector.broadcast %20 : vector<1x512xf32> to vector<8x512xf32>
    %24 = arith.mulf %22, %23 : vector<8x512xf32>
    %25 = arith.addf %17, %24 : vector<8x512xf32>
    %c1_i32 = arith.constant 1 : i32
    %26 = tpu.dynamic_rotate %0 by %c1_i32 dim 1 : vector<1x512xf32>, i32 -> vector<1x512xf32>
    %c3 = arith.constant 3 : index
    %c0_11 = arith.constant 0 : index
    %27 = vector.load %arg2[%c3, %c0_11] : memref<9x512xf32, #tpu.memory_space<vmem>>, vector<1x512xf32>
    %28 = arith.mulf %26, %27 : vector<1x512xf32>
    %c0_12 = arith.constant 0 : index
    %c3_13 = arith.constant 3 : index
    %29 = vector.load %arg3[%c0_12, %c3_13] : memref<8x9xf32, #tpu.memory_space<vmem>>, vector<8x1xf32>
    %30 = vector.broadcast %29 : vector<8x1xf32> to vector<8x512xf32>
    %31 = vector.broadcast %28 : vector<1x512xf32> to vector<8x512xf32>
    %32 = arith.mulf %30, %31 : vector<8x512xf32>
    %33 = arith.addf %25, %32 : vector<8x512xf32>
    %c0_14 = arith.constant 0 : index
    %c4 = arith.constant 4 : index
    %34 = vector.load %arg3[%c0_14, %c4] : memref<8x9xf32, #tpu.memory_space<vmem>>, vector<8x1xf32>
    %35 = vector.broadcast %34 : vector<8x1xf32> to vector<8x512xf32>
    %36 = vector.broadcast %0 : vector<1x512xf32> to vector<8x512xf32>
    %37 = arith.mulf %35, %36 : vector<8x512xf32>
    %38 = arith.addf %33, %37 : vector<8x512xf32>
    %c511_i32 = arith.constant 511 : i32
    %39 = tpu.dynamic_rotate %0 by %c511_i32 dim 1 : vector<1x512xf32>, i32 -> vector<1x512xf32>
    %c5 = arith.constant 5 : index
    %c0_15 = arith.constant 0 : index
    %40 = vector.load %arg2[%c5, %c0_15] : memref<9x512xf32, #tpu.memory_space<vmem>>, vector<1x512xf32>
    %41 = arith.mulf %39, %40 : vector<1x512xf32>
    %c0_16 = arith.constant 0 : index
    %c5_17 = arith.constant 5 : index
    %42 = vector.load %arg3[%c0_16, %c5_17] : memref<8x9xf32, #tpu.memory_space<vmem>>, vector<8x1xf32>
    %43 = vector.broadcast %42 : vector<8x1xf32> to vector<8x512xf32>
    %44 = vector.broadcast %41 : vector<1x512xf32> to vector<8x512xf32>
    %45 = arith.mulf %43, %44 : vector<8x512xf32>
    %46 = arith.addf %38, %45 : vector<8x512xf32>
    %c497_i32 = arith.constant 497 : i32
    %47 = tpu.dynamic_rotate %0 by %c497_i32 dim 1 : vector<1x512xf32>, i32 -> vector<1x512xf32>
    %c6 = arith.constant 6 : index
    %c0_18 = arith.constant 0 : index
    %48 = vector.load %arg2[%c6, %c0_18] : memref<9x512xf32, #tpu.memory_space<vmem>>, vector<1x512xf32>
    %49 = arith.mulf %47, %48 : vector<1x512xf32>
    %c0_19 = arith.constant 0 : index
    %c6_20 = arith.constant 6 : index
    %50 = vector.load %arg3[%c0_19, %c6_20] : memref<8x9xf32, #tpu.memory_space<vmem>>, vector<8x1xf32>
    %51 = vector.broadcast %50 : vector<8x1xf32> to vector<8x512xf32>
    %52 = vector.broadcast %49 : vector<1x512xf32> to vector<8x512xf32>
    %53 = arith.mulf %51, %52 : vector<8x512xf32>
    %54 = arith.addf %46, %53 : vector<8x512xf32>
    %c496_i32 = arith.constant 496 : i32
    %55 = tpu.dynamic_rotate %0 by %c496_i32 dim 1 : vector<1x512xf32>, i32 -> vector<1x512xf32>
    %c7 = arith.constant 7 : index
    %c0_21 = arith.constant 0 : index
    %56 = vector.load %arg2[%c7, %c0_21] : memref<9x512xf32, #tpu.memory_space<vmem>>, vector<1x512xf32>
    %57 = arith.mulf %55, %56 : vector<1x512xf32>
    %c0_22 = arith.constant 0 : index
    %c7_23 = arith.constant 7 : index
    %58 = vector.load %arg3[%c0_22, %c7_23] : memref<8x9xf32, #tpu.memory_space<vmem>>, vector<8x1xf32>
    %59 = vector.broadcast %58 : vector<8x1xf32> to vector<8x512xf32>
    %60 = vector.broadcast %57 : vector<1x512xf32> to vector<8x512xf32>
    %61 = arith.mulf %59, %60 : vector<8x512xf32>
    %62 = arith.addf %54, %61 : vector<8x512xf32>
    %c495_i32 = arith.constant 495 : i32
    %63 = tpu.dynamic_rotate %0 by %c495_i32 dim 1 : vector<1x512xf32>, i32 -> vector<1x512xf32>
    %c8 = arith.constant 8 : index
    %c0_24 = arith.constant 0 : index
    %64 = vector.load %arg2[%c8, %c0_24] : memref<9x512xf32, #tpu.memory_space<vmem>>, vector<1x512xf32>
    %65 = arith.mulf %63, %64 : vector<1x512xf32>
    %c0_25 = arith.constant 0 : index
    %c8_26 = arith.constant 8 : index
    %66 = vector.load %arg3[%c0_25, %c8_26] : memref<8x9xf32, #tpu.memory_space<vmem>>, vector<8x1xf32>
    %67 = vector.broadcast %66 : vector<8x1xf32> to vector<8x512xf32>
    %68 = vector.broadcast %65 : vector<1x512xf32> to vector<8x512xf32>
    %69 = arith.mulf %67, %68 : vector<8x512xf32>
    %70 = arith.addf %62, %69 : vector<8x512xf32>
    %c0_27 = arith.constant 0 : index
    %c0_28 = arith.constant 0 : index
    %71 = vector.load %arg4[%c0_27, %c0_28] : memref<8x1xf32, #tpu.memory_space<vmem>>, vector<8x1xf32>
    %72 = vector.broadcast %71 : vector<8x1xf32> to vector<8x512xf32>
    %73 = arith.addf %70, %72 : vector<8x512xf32>
    %cst_29 = arith.constant 0.000000e+00 : f32
    %74 = vector.broadcast %cst_29 : f32 to vector<8x512xf32>
    %75 = arith.maximumf %73, %74 : vector<8x512xf32>
    %c17_i32_30 = arith.constant 17 : i32
    %76 = tpu.dynamic_rotate %75 by %c17_i32_30 dim 1 : vector<8x512xf32>, i32 -> vector<8x512xf32>
    %c0_31 = arith.constant 0 : index
    %c0_32 = arith.constant 0 : index
    %77 = vector.load %arg2[%c0_31, %c0_32] : memref<9x512xf32, #tpu.memory_space<vmem>>, vector<1x512xf32>
    %78 = vector.broadcast %77 : vector<1x512xf32> to vector<8x512xf32>
    %79 = arith.mulf %76, %78 : vector<8x512xf32>
    %80 = arith.truncf %79 : vector<8x512xf32> to vector<8x512xbf16>
    %c0_33 = arith.constant 0 : index
    %c0_34 = arith.constant 0 : index
    %81 = vector.load %arg10[%c0_33, %c0_34] : memref<72x512xbf16, #tpu.memory_space<vmem>>, vector<8x512xbf16>
    tpu.vector_store %arg10[%c0_33, %c0_34], %80 {strides = array<i32>} : memref<72x512xbf16, #tpu.memory_space<vmem>>, vector<8x512xbf16>,
    %c16_i32_35 = arith.constant 16 : i32
    %82 = tpu.dynamic_rotate %75 by %c16_i32_35 dim 1 : vector<8x512xf32>, i32 -> vector<8x512xf32>
    %c1_36 = arith.constant 1 : index
    %c0_37 = arith.constant 0 : index
    %83 = vector.load %arg2[%c1_36, %c0_37] : memref<9x512xf32, #tpu.memory_space<vmem>>, vector<1x512xf32>
    %84 = vector.broadcast %83 : vector<1x512xf32> to vector<8x512xf32>
    %85 = arith.mulf %82, %84 : vector<8x512xf32>
    %86 = arith.truncf %85 : vector<8x512xf32> to vector<8x512xbf16>
    %c8_38 = arith.constant 8 : index
    %c0_39 = arith.constant 0 : index
    %87 = vector.load %arg10[%c8_38, %c0_39] : memref<72x512xbf16, #tpu.memory_space<vmem>>, vector<8x512xbf16>
    tpu.vector_store %arg10[%c8_38, %c0_39], %86 {strides = array<i32>} : memref<72x512xbf16, #tpu.memory_space<vmem>>, vector<8x512xbf16>,
    %c15_i32_40 = arith.constant 15 : i32
    %88 = tpu.dynamic_rotate %75 by %c15_i32_40 dim 1 : vector<8x512xf32>, i32 -> vector<8x512xf32>
    %c2_41 = arith.constant 2 : index
    %c0_42 = arith.constant 0 : index
    %89 = vector.load %arg2[%c2_41, %c0_42] : memref<9x512xf32, #tpu.memory_space<vmem>>, vector<1x512xf32>
    %90 = vector.broadcast %89 : vector<1x512xf32> to vector<8x512xf32>
    %91 = arith.mulf %88, %90 : vector<8x512xf32>
    %92 = arith.truncf %91 : vector<8x512xf32> to vector<8x512xbf16>
    %c16 = arith.constant 16 : index
    %c0_43 = arith.constant 0 : index
    %93 = vector.load %arg10[%c16, %c0_43] : memref<72x512xbf16, #tpu.memory_space<vmem>>, vector<8x512xbf16>
    tpu.vector_store %arg10[%c16, %c0_43], %92 {strides = array<i32>} : memref<72x512xbf16, #tpu.memory_space<vmem>>, vector<8x512xbf16>,
    %c1_i32_44 = arith.constant 1 : i32
    %94 = tpu.dynamic_rotate %75 by %c1_i32_44 dim 1 : vector<8x512xf32>, i32 -> vector<8x512xf32>
    %c3_45 = arith.constant 3 : index
    %c0_46 = arith.constant 0 : index
    %95 = vector.load %arg2[%c3_45, %c0_46] : memref<9x512xf32, #tpu.memory_space<vmem>>, vector<1x512xf32>
    %96 = vector.broadcast %95 : vector<1x512xf32> to vector<8x512xf32>
    %97 = arith.mulf %94, %96 : vector<8x512xf32>
    %98 = arith.truncf %97 : vector<8x512xf32> to vector<8x512xbf16>
    %c24 = arith.constant 24 : index
    %c0_47 = arith.constant 0 : index
    %99 = vector.load %arg10[%c24, %c0_47] : memref<72x512xbf16, #tpu.memory_space<vmem>>, vector<8x512xbf16>
    tpu.vector_store %arg10[%c24, %c0_47], %98 {strides = array<i32>} : memref<72x512xbf16, #tpu.memory_space<vmem>>, vector<8x512xbf16>,
    %100 = arith.truncf %75 : vector<8x512xf32> to vector<8x512xbf16>
    %c32 = arith.constant 32 : index
    %c0_48 = arith.constant 0 : index
    %101 = vector.load %arg10[%c32, %c0_48] : memref<72x512xbf16, #tpu.memory_space<vmem>>, vector<8x512xbf16>
    tpu.vector_store %arg10[%c32, %c0_48], %100 {strides = array<i32>} : memref<72x512xbf16, #tpu.memory_space<vmem>>, vector<8x512xbf16>,
    %c511_i32_49 = arith.constant 511 : i32
    %102 = tpu.dynamic_rotate %75 by %c511_i32_49 dim 1 : vector<8x512xf32>, i32 -> vector<8x512xf32>
    %c5_50 = arith.constant 5 : index
    %c0_51 = arith.constant 0 : index
    %103 = vector.load %arg2[%c5_50, %c0_51] : memref<9x512xf32, #tpu.memory_space<vmem>>, vector<1x512xf32>
    %104 = vector.broadcast %103 : vector<1x512xf32> to vector<8x512xf32>
    %105 = arith.mulf %102, %104 : vector<8x512xf32>
    %106 = arith.truncf %105 : vector<8x512xf32> to vector<8x512xbf16>
    %c40 = arith.constant 40 : index
    %c0_52 = arith.constant 0 : index
    %107 = vector.load %arg10[%c40, %c0_52] : memref<72x512xbf16, #tpu.memory_space<vmem>>, vector<8x512xbf16>
    tpu.vector_store %arg10[%c40, %c0_52], %106 {strides = array<i32>} : memref<72x512xbf16, #tpu.memory_space<vmem>>, vector<8x512xbf16>,
    %c497_i32_53 = arith.constant 497 : i32
    %108 = tpu.dynamic_rotate %75 by %c497_i32_53 dim 1 : vector<8x512xf32>, i32 -> vector<8x512xf32>
    %c6_54 = arith.constant 6 : index
    %c0_55 = arith.constant 0 : index
    %109 = vector.load %arg2[%c6_54, %c0_55] : memref<9x512xf32, #tpu.memory_space<vmem>>, vector<1x512xf32>
    %110 = vector.broadcast %109 : vector<1x512xf32> to vector<8x512xf32>
    %111 = arith.mulf %108, %110 : vector<8x512xf32>
    %112 = arith.truncf %111 : vector<8x512xf32> to vector<8x512xbf16>
    %c48 = arith.constant 48 : index
    %c0_56 = arith.constant 0 : index
    %113 = vector.load %arg10[%c48, %c0_56] : memref<72x512xbf16, #tpu.memory_space<vmem>>, vector<8x512xbf16>
    tpu.vector_store %arg10[%c48, %c0_56], %112 {strides = array<i32>} : memref<72x512xbf16, #tpu.memory_space<vmem>>, vector<8x512xbf16>,
    %c496_i32_57 = arith.constant 496 : i32
    %114 = tpu.dynamic_rotate %75 by %c496_i32_57 dim 1 : vector<8x512xf32>, i32 -> vector<8x512xf32>
    %c7_58 = arith.constant 7 : index
    %c0_59 = arith.constant 0 : index
    %115 = vector.load %arg2[%c7_58, %c0_59] : memref<9x512xf32, #tpu.memory_space<vmem>>, vector<1x512xf32>
    %116 = vector.broadcast %115 : vector<1x512xf32> to vector<8x512xf32>
    %117 = arith.mulf %114, %116 : vector<8x512xf32>
    %118 = arith.truncf %117 : vector<8x512xf32> to vector<8x512xbf16>
    %c56 = arith.constant 56 : index
    %c0_60 = arith.constant 0 : index
    %119 = vector.load %arg10[%c56, %c0_60] : memref<72x512xbf16, #tpu.memory_space<vmem>>, vector<8x512xbf16>
    tpu.vector_store %arg10[%c56, %c0_60], %118 {strides = array<i32>} : memref<72x512xbf16, #tpu.memory_space<vmem>>, vector<8x512xbf16>,
    %c495_i32_61 = arith.constant 495 : i32
    %120 = tpu.dynamic_rotate %75 by %c495_i32_61 dim 1 : vector<8x512xf32>, i32 -> vector<8x512xf32>
    %c8_62 = arith.constant 8 : index
    %c0_63 = arith.constant 0 : index
    %121 = vector.load %arg2[%c8_62, %c0_63] : memref<9x512xf32, #tpu.memory_space<vmem>>, vector<1x512xf32>
    %122 = vector.broadcast %121 : vector<1x512xf32> to vector<8x512xf32>
    %123 = arith.mulf %120, %122 : vector<8x512xf32>
    %124 = arith.truncf %123 : vector<8x512xf32> to vector<8x512xbf16>
    %c64 = arith.constant 64 : index
    %c0_64 = arith.constant 0 : index
    %125 = vector.load %arg10[%c64, %c0_64] : memref<72x512xbf16, #tpu.memory_space<vmem>>, vector<8x512xbf16>
    tpu.vector_store %arg10[%c64, %c0_64], %124 {strides = array<i32>} : memref<72x512xbf16, #tpu.memory_space<vmem>>, vector<8x512xbf16>,
    %c0_65 = arith.constant 0 : index
    %c0_66 = arith.constant 0 : index
    %126 = vector.load %arg5[%c0_65, %c0_66] : memref<8x72xbf16, #tpu.memory_space<vmem>>, vector<8x72xbf16>
    %c0_67 = arith.constant 0 : index
    %c0_68 = arith.constant 0 : index
    %127 = vector.load %arg10[%c0_67, %c0_68] : memref<72x512xbf16, #tpu.memory_space<vmem>>, vector<72x512xbf16>
    %cst_69 = arith.constant dense<0.000000e+00> : vector<8x512xf32>
    %128 = tpu.matmul %126, %127, %cst_69 {dimension_numbers = #tpu.dot_dimension_numbers<[1], [0], [0], [1], [0, 0, 1, 1], [], []>} : vector<8x72xbf16>, vector<72x512xbf16>, vector<8x512xf32> -> vector<8x512xf32>
    %c0_70 = arith.constant 0 : index
    %c0_71 = arith.constant 0 : index
    %129 = vector.load %arg6[%c0_70, %c0_71] : memref<8x1xf32, #tpu.memory_space<vmem>>, vector<8x1xf32>
    %130 = vector.broadcast %129 : vector<8x1xf32> to vector<8x512xf32>
    %131 = arith.addf %128, %130 : vector<8x512xf32>
    %cst_72 = arith.constant 0.000000e+00 : f32
    %132 = vector.broadcast %cst_72 : f32 to vector<8x512xf32>
    %133 = arith.maximumf %131, %132 : vector<8x512xf32>
    %c17_i32_73 = arith.constant 17 : i32
    %134 = tpu.dynamic_rotate %133 by %c17_i32_73 dim 1 : vector<8x512xf32>, i32 -> vector<8x512xf32>
    %c0_74 = arith.constant 0 : index
    %c0_75 = arith.constant 0 : index
    %135 = vector.load %arg2[%c0_74, %c0_75] : memref<9x512xf32, #tpu.memory_space<vmem>>, vector<1x512xf32>
    %136 = vector.broadcast %135 : vector<1x512xf32> to vector<8x512xf32>
    %137 = arith.mulf %134, %136 : vector<8x512xf32>
    %138 = arith.truncf %137 : vector<8x512xf32> to vector<8x512xbf16>
    %c0_76 = arith.constant 0 : index
    %c0_77 = arith.constant 0 : index
    %139 = vector.load %arg10[%c0_76, %c0_77] : memref<72x512xbf16, #tpu.memory_space<vmem>>, vector<8x512xbf16>
    tpu.vector_store %arg10[%c0_76, %c0_77], %138 {strides = array<i32>} : memref<72x512xbf16, #tpu.memory_space<vmem>>, vector<8x512xbf16>,
    %c16_i32_78 = arith.constant 16 : i32
    %140 = tpu.dynamic_rotate %133 by %c16_i32_78 dim 1 : vector<8x512xf32>, i32 -> vector<8x512xf32>
    %c1_79 = arith.constant 1 : index
    %c0_80 = arith.constant 0 : index
    %141 = vector.load %arg2[%c1_79, %c0_80] : memref<9x512xf32, #tpu.memory_space<vmem>>, vector<1x512xf32>
    %142 = vector.broadcast %141 : vector<1x512xf32> to vector<8x512xf32>
    %143 = arith.mulf %140, %142 : vector<8x512xf32>
    %144 = arith.truncf %143 : vector<8x512xf32> to vector<8x512xbf16>
    %c8_81 = arith.constant 8 : index
    %c0_82 = arith.constant 0 : index
    %145 = vector.load %arg10[%c8_81, %c0_82] : memref<72x512xbf16, #tpu.memory_space<vmem>>, vector<8x512xbf16>
    tpu.vector_store %arg10[%c8_81, %c0_82], %144 {strides = array<i32>} : memref<72x512xbf16, #tpu.memory_space<vmem>>, vector<8x512xbf16>,
    %c15_i32_83 = arith.constant 15 : i32
    %146 = tpu.dynamic_rotate %133 by %c15_i32_83 dim 1 : vector<8x512xf32>, i32 -> vector<8x512xf32>
    %c2_84 = arith.constant 2 : index
    %c0_85 = arith.constant 0 : index
    %147 = vector.load %arg2[%c2_84, %c0_85] : memref<9x512xf32, #tpu.memory_space<vmem>>, vector<1x512xf32>
    %148 = vector.broadcast %147 : vector<1x512xf32> to vector<8x512xf32>
    %149 = arith.mulf %146, %148 : vector<8x512xf32>
    %150 = arith.truncf %149 : vector<8x512xf32> to vector<8x512xbf16>
    %c16_86 = arith.constant 16 : index
    %c0_87 = arith.constant 0 : index
    %151 = vector.load %arg10[%c16_86, %c0_87] : memref<72x512xbf16, #tpu.memory_space<vmem>>, vector<8x512xbf16>
    tpu.vector_store %arg10[%c16_86, %c0_87], %150 {strides = array<i32>} : memref<72x512xbf16, #tpu.memory_space<vmem>>, vector<8x512xbf16>,
    %c1_i32_88 = arith.constant 1 : i32
    %152 = tpu.dynamic_rotate %133 by %c1_i32_88 dim 1 : vector<8x512xf32>, i32 -> vector<8x512xf32>
    %c3_89 = arith.constant 3 : index
    %c0_90 = arith.constant 0 : index
    %153 = vector.load %arg2[%c3_89, %c0_90] : memref<9x512xf32, #tpu.memory_space<vmem>>, vector<1x512xf32>
    %154 = vector.broadcast %153 : vector<1x512xf32> to vector<8x512xf32>
    %155 = arith.mulf %152, %154 : vector<8x512xf32>
    %156 = arith.truncf %155 : vector<8x512xf32> to vector<8x512xbf16>
    %c24_91 = arith.constant 24 : index
    %c0_92 = arith.constant 0 : index
    %157 = vector.load %arg10[%c24_91, %c0_92] : memref<72x512xbf16, #tpu.memory_space<vmem>>, vector<8x512xbf16>
    tpu.vector_store %arg10[%c24_91, %c0_92], %156 {strides = array<i32>} : memref<72x512xbf16, #tpu.memory_space<vmem>>, vector<8x512xbf16>,
    %158 = arith.truncf %133 : vector<8x512xf32> to vector<8x512xbf16>
    %c32_93 = arith.constant 32 : index
    %c0_94 = arith.constant 0 : index
    %159 = vector.load %arg10[%c32_93, %c0_94] : memref<72x512xbf16, #tpu.memory_space<vmem>>, vector<8x512xbf16>
    tpu.vector_store %arg10[%c32_93, %c0_94], %158 {strides = array<i32>} : memref<72x512xbf16, #tpu.memory_space<vmem>>, vector<8x512xbf16>,
    %c511_i32_95 = arith.constant 511 : i32
    %160 = tpu.dynamic_rotate %133 by %c511_i32_95 dim 1 : vector<8x512xf32>, i32 -> vector<8x512xf32>
    %c5_96 = arith.constant 5 : index
    %c0_97 = arith.constant 0 : index
    %161 = vector.load %arg2[%c5_96, %c0_97] : memref<9x512xf32, #tpu.memory_space<vmem>>, vector<1x512xf32>
    %162 = vector.broadcast %161 : vector<1x512xf32> to vector<8x512xf32>
    %163 = arith.mulf %160, %162 : vector<8x512xf32>
    %164 = arith.truncf %163 : vector<8x512xf32> to vector<8x512xbf16>
    %c40_98 = arith.constant 40 : index
    %c0_99 = arith.constant 0 : index
    %165 = vector.load %arg10[%c40_98, %c0_99] : memref<72x512xbf16, #tpu.memory_space<vmem>>, vector<8x512xbf16>
    tpu.vector_store %arg10[%c40_98, %c0_99], %164 {strides = array<i32>} : memref<72x512xbf16, #tpu.memory_space<vmem>>, vector<8x512xbf16>,
    %c497_i32_100 = arith.constant 497 : i32
    %166 = tpu.dynamic_rotate %133 by %c497_i32_100 dim 1 : vector<8x512xf32>, i32 -> vector<8x512xf32>
    %c6_101 = arith.constant 6 : index
    %c0_102 = arith.constant 0 : index
    %167 = vector.load %arg2[%c6_101, %c0_102] : memref<9x512xf32, #tpu.memory_space<vmem>>, vector<1x512xf32>
    %168 = vector.broadcast %167 : vector<1x512xf32> to vector<8x512xf32>
    %169 = arith.mulf %166, %168 : vector<8x512xf32>
    %170 = arith.truncf %169 : vector<8x512xf32> to vector<8x512xbf16>
    %c48_103 = arith.constant 48 : index
    %c0_104 = arith.constant 0 : index
    %171 = vector.load %arg10[%c48_103, %c0_104] : memref<72x512xbf16, #tpu.memory_space<vmem>>, vector<8x512xbf16>
    tpu.vector_store %arg10[%c48_103, %c0_104], %170 {strides = array<i32>} : memref<72x512xbf16, #tpu.memory_space<vmem>>, vector<8x512xbf16>,
    %c496_i32_105 = arith.constant 496 : i32
    %172 = tpu.dynamic_rotate %133 by %c496_i32_105 dim 1 : vector<8x512xf32>, i32 -> vector<8x512xf32>
    %c7_106 = arith.constant 7 : index
    %c0_107 = arith.constant 0 : index
    %173 = vector.load %arg2[%c7_106, %c0_107] : memref<9x512xf32, #tpu.memory_space<vmem>>, vector<1x512xf32>
    %174 = vector.broadcast %173 : vector<1x512xf32> to vector<8x512xf32>
    %175 = arith.mulf %172, %174 : vector<8x512xf32>
    %176 = arith.truncf %175 : vector<8x512xf32> to vector<8x512xbf16>
    %c56_108 = arith.constant 56 : index
    %c0_109 = arith.constant 0 : index
    %177 = vector.load %arg10[%c56_108, %c0_109] : memref<72x512xbf16, #tpu.memory_space<vmem>>, vector<8x512xbf16>
    tpu.vector_store %arg10[%c56_108, %c0_109], %176 {strides = array<i32>} : memref<72x512xbf16, #tpu.memory_space<vmem>>, vector<8x512xbf16>,
    %c495_i32_110 = arith.constant 495 : i32
    %178 = tpu.dynamic_rotate %133 by %c495_i32_110 dim 1 : vector<8x512xf32>, i32 -> vector<8x512xf32>
    %c8_111 = arith.constant 8 : index
    %c0_112 = arith.constant 0 : index
    %179 = vector.load %arg2[%c8_111, %c0_112] : memref<9x512xf32, #tpu.memory_space<vmem>>, vector<1x512xf32>
    %180 = vector.broadcast %179 : vector<1x512xf32> to vector<8x512xf32>
    %181 = arith.mulf %178, %180 : vector<8x512xf32>
    %182 = arith.truncf %181 : vector<8x512xf32> to vector<8x512xbf16>
    %c64_113 = arith.constant 64 : index
    %c0_114 = arith.constant 0 : index
    %183 = vector.load %arg10[%c64_113, %c0_114] : memref<72x512xbf16, #tpu.memory_space<vmem>>, vector<8x512xbf16>
    tpu.vector_store %arg10[%c64_113, %c0_114], %182 {strides = array<i32>} : memref<72x512xbf16, #tpu.memory_space<vmem>>, vector<8x512xbf16>,
    %c0_115 = arith.constant 0 : index
    %c0_116 = arith.constant 0 : index
    %184 = vector.load %arg7[%c0_115, %c0_116] : memref<3x72xbf16, #tpu.memory_space<vmem>>, vector<3x72xbf16>
    %c0_117 = arith.constant 0 : index
    %c0_118 = arith.constant 0 : index
    %185 = vector.load %arg10[%c0_117, %c0_118] : memref<72x512xbf16, #tpu.memory_space<vmem>>, vector<72x512xbf16>
    %cst_119 = arith.constant dense<0.000000e+00> : vector<3x512xf32>
    %186 = tpu.matmul %184, %185, %cst_119 {dimension_numbers = #tpu.dot_dimension_numbers<[1], [0], [0], [1], [0, 0, 1, 1], [], []>} : vector<3x72xbf16>, vector<72x512xbf16>, vector<3x512xf32> -> vector<3x512xf32>
    %c0_120 = arith.constant 0 : index
    %c0_121 = arith.constant 0 : index
    %187 = vector.load %arg8[%c0_120, %c0_121] : memref<3x1xf32, #tpu.memory_space<vmem>>, vector<3x1xf32>
    %188 = vector.broadcast %187 : vector<3x1xf32> to vector<3x512xf32>
    %189 = arith.addf %186, %188 : vector<3x512xf32>
    %190 = math.tanh %189 : vector<3x512xf32>
    %c0_122 = arith.constant 0 : index
    %c0_123 = arith.constant 0 : index
    %191 = vector.load %arg9[%c0_122, %c0_123] : memref<3x512xf32, #tpu.memory_space<vmem>>, vector<3x512xf32>
    tpu.vector_store %arg9[%c0_122, %c0_123], %190 {strides = array<i32>} : memref<3x512xf32, #tpu.memory_space<vmem>>, vector<3x512xf32>,
    return
  }
  func.func @transform_0(%arg0: i32) -> (i32, i32) {
    %c0_i32 = arith.constant 0 : i32
    %c0_i32_0 = arith.constant 0 : i32
    return %c0_i32, %arg0 : i32, i32
  }
  func.func @transform_1(%arg0: i32) -> (i32, i32) {
    %c0_i32 = arith.constant 0 : i32
    %c0_i32_0 = arith.constant 0 : i32
    %c0_i32_1 = arith.constant 0 : i32
    return %c0_i32, %c0_i32_0 : i32, i32
  }
  func.func @transform_2(%arg0: i32) -> (i32, i32) {
    %c0_i32 = arith.constant 0 : i32
    %c0_i32_0 = arith.constant 0 : i32
    %c0_i32_1 = arith.constant 0 : i32
    return %c0_i32, %c0_i32_0 : i32, i32
  }
  func.func @transform_3(%arg0: i32) -> (i32, i32) {
    %c0_i32 = arith.constant 0 : i32
    %c0_i32_0 = arith.constant 0 : i32
    %c0_i32_1 = arith.constant 0 : i32
    return %c0_i32, %c0_i32_0 : i32, i32
  }
  func.func @transform_4(%arg0: i32) -> (i32, i32) {
    %c0_i32 = arith.constant 0 : i32
    %c0_i32_0 = arith.constant 0 : i32
    %c0_i32_1 = arith.constant 0 : i32
    return %c0_i32, %c0_i32_0 : i32, i32
  }
  func.func @transform_5(%arg0: i32) -> (i32, i32) {
    %c0_i32 = arith.constant 0 : i32
    %c0_i32_0 = arith.constant 0 : i32
    %c0_i32_1 = arith.constant 0 : i32
    return %c0_i32, %c0_i32_0 : i32, i32
  }
  func.func @transform_6(%arg0: i32) -> (i32, i32) {
    %c0_i32 = arith.constant 0 : i32
    %c0_i32_0 = arith.constant 0 : i32
    %c0_i32_1 = arith.constant 0 : i32
    return %c0_i32, %c0_i32_0 : i32, i32
  }
  func.func @transform_7(%arg0: i32) -> (i32, i32) {
    %c0_i32 = arith.constant 0 : i32
    %c0_i32_0 = arith.constant 0 : i32
    %c0_i32_1 = arith.constant 0 : i32
    return %c0_i32, %c0_i32_0 : i32, i32
  }
  func.func @transform_8(%arg0: i32) -> (i32, i32) {
    %c0_i32 = arith.constant 0 : i32
    %c0_i32_0 = arith.constant 0 : i32
    return %c0_i32, %arg0 : i32, i32
  }
}

</mosaic_0001>

<llo_original>
// kernel: decode_net_pro_forward.1
$region0: #{decode_net_pro_forward.1}
  #allocation0 [shape = 'u32[]', space=smem, size = 0x4, offset = 0x4, fixed_abs, tag = 'smem constant byte address 0x4 - core index']
  #allocation1 [shape = 'u32[144,128]{1,0:T(1,128)}', space=vmem, size = 0x12000, scoped, tag = 'internal scratch']
  #allocation2 [shape = 'bf16[72,512]{1,0:T(8,128)(2,1)}', space=vmem, size = 0x12000, scoped, tag = 'scratch operand']
  %s0 = inlined_call_operand.vmem [shape: f32[1,512], index: 0, kind: input, shape index: {}]
  %s1 = inlined_call_operand.vmem [shape: f32[9,512], index: 1, kind: input, shape index: {}]
  %s2 = inlined_call_operand.vmem [shape: f32[8,9], index: 2, kind: input, shape index: {}]
  %s3 = inlined_call_operand.vmem [shape: f32[8,1], index: 3, kind: input, shape index: {}]
  %s4 = inlined_call_operand.vmem [shape: bf16[8,72], index: 4, kind: input, shape index: {}]
  %s5 = inlined_call_operand.vmem [shape: f32[8,1], index: 5, kind: input, shape index: {}]
  %s6 = inlined_call_operand.vmem [shape: bf16[3,72], index: 6, kind: input, shape index: {}]
  %s7 = inlined_call_operand.vmem [shape: f32[3,1], index: 7, kind: input, shape index: {}]
  %s8 = inlined_call_operand.vmem [shape: f32[3,512], index: 8, kind: output, shape index: {}]
  %s9 = sld [smem:[#allocation0]]
  $region42: #{decode_net_pro_forward.1} parent=0
    _
  %s11 = ssub.s32 1, %s9
  %s12 = scalar_select 0, %s11, %s9
  // Predicated region
  $region2: #{decode_net_pro_forward.1} parent=0 // pred_check
    _
  $region3: #{decode_net_pro_forward.1} parent=0 // pred_check_branch
    %14 = sbr.rel (0) target = $region5
  $region4: #{decode_net_pro_forward.1} parent=0 // pred_region
    _
  $region5: #{decode_net_pro_forward.1} parent=0 // pred_fallthru
    _
  // Predicated region
  $region6: #{decode_net_pro_forward.1} parent=0 // pred_check
    _
  $region7: #{decode_net_pro_forward.1} parent=0 // pred_check_branch
    %16 = sbr.rel (0) target = $region9
  $region8: #{decode_net_pro_forward.1} parent=0 // pred_region
    _
  $region9: #{decode_net_pro_forward.1} parent=0 // pred_fallthru
    _
  // Predicated region
  $region10: #{decode_net_pro_forward.1} parent=0 // pred_check
    _
  $region11: #{decode_net_pro_forward.1} parent=0 // pred_check_branch
    %18 = sbr.rel (0) target = $region13
  $region12: #{decode_net_pro_forward.1} parent=0 // pred_region
    _
  $region13: #{decode_net_pro_forward.1} parent=0 // pred_fallthru
    _
  // Predicated region
  $region14: #{decode_net_pro_forward.1} parent=0 // pred_check
    _
  $region15: #{decode_net_pro_forward.1} parent=0 // pred_check_branch
    %20 = sbr.rel (0) target = $region17
  $region16: #{decode_net_pro_forward.1} parent=0 // pred_region
    _
  $region17: #{decode_net_pro_forward.1} parent=0 // pred_fallthru
    _
  // Predicated region
  $region18: #{decode_net_pro_forward.1} parent=0 // pred_check
    _
  $region19: #{decode_net_pro_forward.1} parent=0 // pred_check_branch
    %22 = sbr.rel (0) target = $region21
  $region20: #{decode_net_pro_forward.1} parent=0 // pred_region
    _
  $region21: #{decode_net_pro_forward.1} parent=0 // pred_fallthru
    _
  // Predicated region
  $region22: #{decode_net_pro_forward.1} parent=0 // pred_check
    _
  $region23: #{decode_net_pro_forward.1} parent=0 // pred_check_branch
    %24 = sbr.rel (0) target = $region25
  $region24: #{decode_net_pro_forward.1} parent=0 // pred_region
    _
  $region25: #{decode_net_pro_forward.1} parent=0 // pred_fallthru
    _
  // Predicated region
  $region26: #{decode_net_pro_forward.1} parent=0 // pred_check
    _
  $region27: #{decode_net_pro_forward.1} parent=0 // pred_check_branch
    %26 = sbr.rel (0) target = $region29
  $region28: #{decode_net_pro_forward.1} parent=0 // pred_region
    _
  $region29: #{decode_net_pro_forward.1} parent=0 // pred_fallthru
    _
  // Predicated region
  $region30: #{decode_net_pro_forward.1} parent=0 // pred_check
    _
  $region31: #{decode_net_pro_forward.1} parent=0 // pred_check_branch
    %28 = sbr.rel (0) target = $region33
  $region32: #{decode_net_pro_forward.1} parent=0 // pred_region
    _
  $region33: #{decode_net_pro_forward.1} parent=0 // pred_fallthru
    _
  %v30 = vld [vmem:[%s0] sm:$0xf]
  %v32 = vlaneseq
  %v33 = vshrl.u32 %v32, 7
  %v34 = vsub.s32 0, %v33
  %v35 = vrot.slane %v30, %v34
  %v36 = vlaneseq
  %v37 = vshrl.u32 %v36, 7
  %v38 = vsub.s32 1, %v37
  %v39 = vrot.slane %v30, %v38
  %v40 = vlaneseq
  %v41 = vshrl.u32 %v40, 7
  %v42 = vsub.s32 2, %v41
  %v43 = vrot.slane %v30, %v42
  %v44 = vlaneseq
  %v45 = vshrl.u32 %v44, 7
  %v46 = vsub.s32 3, %v45
  %v47 = vrot.slane %v30, %v46
  %52 = vrot.lane.b32.xlu0 %v35, 17
  %v53 = vpop.permute.xlu0 %52
  %54 = vrot.lane.b32.xlu0 %v39, 17
  %v55 = vpop.permute.xlu0 %54
  %56 = vrot.lane.b32.xlu0 %v43, 17
  %v57 = vpop.permute.xlu0 %56
  %58 = vrot.lane.b32.xlu0 %v47, 17
  %v59 = vpop.permute.xlu0 %58
  %v60 = vlaneseq
  %v61 = vand.u32 %v60, 127
  %vm62 = vcmp.lt.s32.totalorder %v61, 17
  %v63 = vsel %vm62, %v57, %v59
  %v64 = vsel %vm62, %v55, %v57
  %v65 = vsel %vm62, %v53, %v55
  %v66 = vsel %vm62, %v59, %v53
  %v67 = vld [vmem:[%s1] ss:$8 sm:$0xf]
  %v69 = vlaneseq
  %v70 = vshrl.u32 %v69, 7
  %v71 = vsub.s32 0, %v70
  %v72 = vrot.slane %v67, %v71
  %v73 = vlaneseq
  %v74 = vshrl.u32 %v73, 7
  %v75 = vsub.s32 1, %v74
  %v76 = vrot.slane %v67, %v75
  %v77 = vlaneseq
  %v78 = vshrl.u32 %v77, 7
  %v79 = vsub.s32 2, %v78
  %v80 = vrot.slane %v67, %v79
  %v81 = vlaneseq
  %v82 = vshrl.u32 %v81, 7
  %v83 = vsub.s32 3, %v82
  %v84 = vrot.slane %v67, %v83
  %v89 = vmul.f32 %v66, %v72
  %v90 = vmul.f32 %v65, %v76
  %v91 = vmul.f32 %v64, %v80
  %v92 = vmul.f32 %v63, %v84
  %v93 = vld [vmem:[%s2] sm:$0xff]
  %95 = vset.pattern.permute.xlu0 0
  %96 = vperm.xlu0 %95, %v93
  %v97 = vpop.permute.xlu0 %96
  %v99 = vlaneseq
  %v100 = vshrl.u32 %v99, 7
  %v101 = vsub.s32 0, %v100
  %v102 = vrot.slane %v89, %v101
  %v103 = vlaneseq
  %v104 = vshrl.u32 %v103, 7
  %v105 = vsub.s32 0, %v104
  %v106 = vrot.slane %v90, %v105
  %v107 = vlaneseq
  %v108 = vshrl.u32 %v107, 7
  %v109 = vsub.s32 0, %v108
  %v110 = vrot.slane %v91, %v109
  %v111 = vlaneseq
  %v112 = vshrl.u32 %v111, 7
  %v113 = vsub.s32 0, %v112
  %v114 = vrot.slane %v92, %v113
  %v115 = vmul.f32 %v97, %v102
  %v116 = vmul.f32 %v97, %v106
  %v117 = vmul.f32 %v97, %v110
  %v118 = vmul.f32 %v97, %v114
  %v119 = vadd.f32 %v115, 0.0
  %v120 = vadd.f32 %v116, 0.0
  %v121 = vadd.f32 %v117, 0.0
  %v122 = vadd.f32 %v118, 0.0
  %123 = vrot.lane.b32.xlu0 %v35, 16
  %v124 = vpop.permute.xlu0 %123
  %125 = vrot.lane.b32.xlu0 %v39, 16
  %v126 = vpop.permute.xlu0 %125
  %127 = vrot.lane.b32.xlu0 %v43, 16
  %v128 = vpop.permute.xlu0 %127
  %129 = vrot.lane.b32.xlu0 %v47, 16
  %v130 = vpop.permute.xlu0 %129
  %vm131 = vcmp.lt.s32.totalorder %v61, 16
  %v132 = vsel %vm131, %v128, %v130
  %v133 = vsel %vm131, %v126, %v128
  %v134 = vsel %vm131, %v124, %v126
  %v135 = vsel %vm131, %v130, %v124
  %s136 = scalar_lea.vmem %s1, 1
  %v137 = vld [vmem:[%s136] ss:$8 sm:$0xf]
  %v139 = vlaneseq
  %v140 = vshrl.u32 %v139, 7
  %v141 = vsub.s32 0, %v140
  %v142 = vrot.slane %v137, %v141
  %v143 = vlaneseq
  %v144 = vshrl.u32 %v143, 7
  %v145 = vsub.s32 1, %v144
  %v146 = vrot.slane %v137, %v145
  %v147 = vlaneseq
  %v148 = vshrl.u32 %v147, 7
  %v149 = vsub.s32 2, %v148
  %v150 = vrot.slane %v137, %v149
  %v151 = vlaneseq
  %v152 = vshrl.u32 %v151, 7
  %v153 = vsub.s32 3, %v152
  %v154 = vrot.slane %v137, %v153
  %v159 = vmul.f32 %v135, %v142
  %v160 = vmul.f32 %v134, %v146
  %v161 = vmul.f32 %v133, %v150
  %v162 = vmul.f32 %v132, %v154
  %163 = vset.pattern.permute.xlu0 1
  %164 = vperm.xlu0 %163, %v93
  %v165 = vpop.permute.xlu0 %164
  %v167 = vlaneseq
  %v168 = vshrl.u32 %v167, 7
  %v169 = vsub.s32 0, %v168
  %v170 = vrot.slane %v159, %v169
  %v171 = vlaneseq
  %v172 = vshrl.u32 %v171, 7
  %v173 = vsub.s32 0, %v172
  %v174 = vrot.slane %v160, %v173
  %v175 = vlaneseq
  %v176 = vshrl.u32 %v175, 7
  %v177 = vsub.s32 0, %v176
  %v178 = vrot.slane %v161, %v177
  %v179 = vlaneseq
  %v180 = vshrl.u32 %v179, 7
  %v181 = vsub.s32 0, %v180
  %v182 = vrot.slane %v162, %v181
  %v183 = vmul.f32 %v165, %v170
  %v184 = vmul.f32 %v165, %v174
  %v185 = vmul.f32 %v165, %v178
  %v186 = vmul.f32 %v165, %v182
  %v187 = vadd.f32 %v119, %v183
  %v188 = vadd.f32 %v120, %v184
  %v189 = vadd.f32 %v121, %v185
  %v190 = vadd.f32 %v122, %v186
  %191 = vrot.lane.b32.xlu0 %v35, 15
  %v192 = vpop.permute.xlu0 %191
  %193 = vrot.lane.b32.xlu0 %v39, 15
  %v194 = vpop.permute.xlu0 %193
  %195 = vrot.lane.b32.xlu0 %v43, 15
  %v196 = vpop.permute.xlu0 %195
  %197 = vrot.lane.b32.xlu0 %v47, 15
  %v198 = vpop.permute.xlu0 %197
  %vm199 = vcmp.lt.s32.totalorder %v61, 15
  %v200 = vsel %vm199, %v196, %v198
  %v201 = vsel %vm199, %v194, %v196
  %v202 = vsel %vm199, %v192, %v194
  %v203 = vsel %vm199, %v198, %v192
  %s204 = scalar_lea.vmem %s1, 2
  %v205 = vld [vmem:[%s204] ss:$8 sm:$0xf]
  %v207 = vlaneseq
  %v208 = vshrl.u32 %v207, 7
  %v209 = vsub.s32 0, %v208
  %v210 = vrot.slane %v205, %v209
  %v211 = vlaneseq
  %v212 = vshrl.u32 %v211, 7
  %v213 = vsub.s32 1, %v212
  %v214 = vrot.slane %v205, %v213
  %v215 = vlaneseq
  %v216 = vshrl.u32 %v215, 7
  %v217 = vsub.s32 2, %v216
  %v218 = vrot.slane %v205, %v217
  %v219 = vlaneseq
  %v220 = vshrl.u32 %v219, 7
  %v221 = vsub.s32 3, %v220
  %v222 = vrot.slane %v205, %v221
  %v227 = vmul.f32 %v203, %v210
  %v228 = vmul.f32 %v202, %v214
  %v229 = vmul.f32 %v201, %v218
  %v230 = vmul.f32 %v200, %v222
  %231 = vset.pattern.permute.xlu0 2
  %232 = vperm.xlu0 %231, %v93
  %v233 = vpop.permute.xlu0 %232
  %v235 = vlaneseq
  %v236 = vshrl.u32 %v235, 7
  %v237 = vsub.s32 0, %v236
  %v238 = vrot.slane %v227, %v237
  %v239 = vlaneseq
  %v240 = vshrl.u32 %v239, 7
  %v241 = vsub.s32 0, %v240
  %v242 = vrot.slane %v228, %v241
  %v243 = vlaneseq
  %v244 = vshrl.u32 %v243, 7
  %v245 = vsub.s32 0, %v244
  %v246 = vrot.slane %v229, %v245
  %v247 = vlaneseq
  %v248 = vshrl.u32 %v247, 7
  %v249 = vsub.s32 0, %v248
  %v250 = vrot.slane %v230, %v249
  %v251 = vmul.f32 %v233, %v238
  %v252 = vmul.f32 %v233, %v242
  %v253 = vmul.f32 %v233, %v246
  %v254 = vmul.f32 %v233, %v250
  %v255 = vadd.f32 %v187, %v251
  %v256 = vadd.f32 %v188, %v252
  %v257 = vadd.f32 %v189, %v253
  %v258 = vadd.f32 %v190, %v254
  %259 = vrot.lane.b32.xlu0 %v35, 1
  %v260 = vpop.permute.xlu0 %259
  %261 = vrot.lane.b32.xlu0 %v39, 1
  %v262 = vpop.permute.xlu0 %261
  %263 = vrot.lane.b32.xlu0 %v43, 1
  %v264 = vpop.permute.xlu0 %263
  %265 = vrot.lane.b32.xlu0 %v47, 1
  %v266 = vpop.permute.xlu0 %265
  %vm267 = vcmp.lt.s32.totalorder %v61, 1
  %v268 = vsel %vm267, %v264, %v266
  %v269 = vsel %vm267, %v262, %v264
  %v270 = vsel %vm267, %v260, %v262
  %v271 = vsel %vm267, %v266, %v260
  %s272 = scalar_lea.vmem %s1, 3
  %v273 = vld [vmem:[%s272] ss:$8 sm:$0xf]
  %v275 = vlaneseq
  %v276 = vshrl.u32 %v275, 7
  %v277 = vsub.s32 0, %v276
  %v278 = vrot.slane %v273, %v277
  %v279 = vlaneseq
  %v280 = vshrl.u32 %v279, 7
  %v281 = vsub.s32 1, %v280
  %v282 = vrot.slane %v273, %v281
  %v283 = vlaneseq
  %v284 = vshrl.u32 %v283, 7
  %v285 = vsub.s32 2, %v284
  %v286 = vrot.slane %v273, %v285
  %v287 = vlaneseq
  %v288 = vshrl.u32 %v287, 7
  %v289 = vsub.s32 3, %v288
  %v290 = vrot.slane %v273, %v289
  %v295 = vmul.f32 %v271, %v278
  %v296 = vmul.f32 %v270, %v282
  %v297 = vmul.f32 %v269, %v286
  %v298 = vmul.f32 %v268, %v290
  %299 = vset.pattern.permute.xlu0 3
  %300 = vperm.xlu0 %299, %v93
  %v301 = vpop.permute.xlu0 %300
  %v303 = vlaneseq
  %v304 = vshrl.u32 %v303, 7
  %v305 = vsub.s32 0, %v304
  %v306 = vrot.slane %v295, %v305
  %v307 = vlaneseq
  %v308 = vshrl.u32 %v307, 7
  %v309 = vsub.s32 0, %v308
  %v310 = vrot.slane %v296, %v309
  %v311 = vlaneseq
  %v312 = vshrl.u32 %v311, 7
  %v313 = vsub.s32 0, %v312
  %v314 = vrot.slane %v297, %v313
  %v315 = vlaneseq
  %v316 = vshrl.u32 %v315, 7
  %v317 = vsub.s32 0, %v316
  %v318 = vrot.slane %v298, %v317
  %v319 = vmul.f32 %v301, %v306
  %v320 = vmul.f32 %v301, %v310
  %v321 = vmul.f32 %v301, %v314
  %v322 = vmul.f32 %v301, %v318
  %v323 = vadd.f32 %v255, %v319
  %v324 = vadd.f32 %v256, %v320
  %v325 = vadd.f32 %v257, %v321
  %v326 = vadd.f32 %v258, %v322
  %327 = vset.pattern.permute.xlu0 4
  %328 = vperm.xlu0 %327, %v93
  %v329 = vpop.permute.xlu0 %328
  %v331 = vmul.f32 %v329, %v35
  %v332 = vmul.f32 %v329, %v39
  %v333 = vmul.f32 %v329, %v43
  %v334 = vmul.f32 %v329, %v47
  %v335 = vadd.f32 %v323, %v331
  %v336 = vadd.f32 %v324, %v332
  %v337 = vadd.f32 %v325, %v333
  %v338 = vadd.f32 %v326, %v334
  %339 = vrot.lane.b32.xlu0 %v35, 127
  %v340 = vpop.permute.xlu0 %339
  %341 = vrot.lane.b32.xlu0 %v39, 127
  %v342 = vpop.permute.xlu0 %341
  %343 = vrot.lane.b32.xlu0 %v43, 127
  %v344 = vpop.permute.xlu0 %343
  %345 = vrot.lane.b32.xlu0 %v47, 127
  %v346 = vpop.permute.xlu0 %345
  %vm347 = vcmp.lt.s32.totalorder %v61, 127
  %v348 = vsel %vm347, %v344, %v346
  %v349 = vsel %vm347, %v342, %v344
  %v350 = vsel %vm347, %v340, %v342
  %v351 = vsel %vm347, %v346, %v340
  %s352 = scalar_lea.vmem %s1, 5
  %v353 = vld [vmem:[%s352] ss:$8 sm:$0xf]
  %v355 = vlaneseq
  %v356 = vshrl.u32 %v355, 7
  %v357 = vsub.s32 0, %v356
  %v358 = vrot.slane %v353, %v357
  %v359 = vlaneseq
  %v360 = vshrl.u32 %v359, 7
  %v361 = vsub.s32 1, %v360
  %v362 = vrot.slane %v353, %v361
  %v363 = vlaneseq
  %v364 = vshrl.u32 %v363, 7
  %v365 = vsub.s32 2, %v364
  %v366 = vrot.slane %v353, %v365
  %v367 = vlaneseq
  %v368 = vshrl.u32 %v367, 7
  %v369 = vsub.s32 3, %v368
  %v370 = vrot.slane %v353, %v369
  %v375 = vmul.f32 %v350, %v358
  %v376 = vmul.f32 %v349, %v362
  %v377 = vmul.f32 %v348, %v366
  %v378 = vmul.f32 %v351, %v370
  %379 = vset.pattern.permute.xlu0 5
  %380 = vperm.xlu0 %379, %v93
  %v381 = vpop.permute.xlu0 %380
  %v383 = vlaneseq
  %v384 = vshrl.u32 %v383, 7
  %v385 = vsub.s32 0, %v384
  %v386 = vrot.slane %v375, %v385
  %v387 = vlaneseq
  %v388 = vshrl.u32 %v387, 7
  %v389 = vsub.s32 0, %v388
  %v390 = vrot.slane %v376, %v389
  %v391 = vlaneseq
  %v392 = vshrl.u32 %v391, 7
  %v393 = vsub.s32 0, %v392
  %v394 = vrot.slane %v377, %v393
  %v395 = vlaneseq
  %v396 = vshrl.u32 %v395, 7
  %v397 = vsub.s32 0, %v396
  %v398 = vrot.slane %v378, %v397
  %v399 = vmul.f32 %v381, %v386
  %v400 = vmul.f32 %v381, %v390
  %v401 = vmul.f32 %v381, %v394
  %v402 = vmul.f32 %v381, %v398
  %v403 = vadd.f32 %v335, %v399
  %v404 = vadd.f32 %v336, %v400
  %v405 = vadd.f32 %v337, %v401
  %v406 = vadd.f32 %v338, %v402
  %407 = vrot.lane.b32.xlu0 %v35, 113
  %v408 = vpop.permute.xlu0 %407
  %409 = vrot.lane.b32.xlu0 %v39, 113
  %v410 = vpop.permute.xlu0 %409
  %411 = vrot.lane.b32.xlu0 %v43, 113
  %v412 = vpop.permute.xlu0 %411
  %413 = vrot.lane.b32.xlu0 %v47, 113
  %v414 = vpop.permute.xlu0 %413
  %vm415 = vcmp.lt.s32.totalorder %v61, 113
  %v416 = vsel %vm415, %v412, %v414
  %v417 = vsel %vm415, %v410, %v412
  %v418 = vsel %vm415, %v408, %v410
  %v419 = vsel %vm415, %v414, %v408
  %s420 = scalar_lea.vmem %s1, 6
  %v421 = vld [vmem:[%s420] ss:$8 sm:$0xf]
  %v423 = vlaneseq
  %v424 = vshrl.u32 %v423, 7
  %v425 = vsub.s32 0, %v424
  %v426 = vrot.slane %v421, %v425
  %v427 = vlaneseq
  %v428 = vshrl.u32 %v427, 7
  %v429 = vsub.s32 1, %v428
  %v430 = vrot.slane %v421, %v429
  %v431 = vlaneseq
  %v432 = vshrl.u32 %v431, 7
  %v433 = vsub.s32 2, %v432
  %v434 = vrot.slane %v421, %v433
  %v435 = vlaneseq
  %v436 = vshrl.u32 %v435, 7
  %v437 = vsub.s32 3, %v436
  %v438 = vrot.slane %v421, %v437
  %v443 = vmul.f32 %v418, %v426
  %v444 = vmul.f32 %v417, %v430
  %v445 = vmul.f32 %v416, %v434
  %v446 = vmul.f32 %v419, %v438
  %447 = vset.pattern.permute.xlu0 6
  %448 = vperm.xlu0 %447, %v93
  %v449 = vpop.permute.xlu0 %448
  %v451 = vlaneseq
  %v452 = vshrl.u32 %v451, 7
  %v453 = vsub.s32 0, %v452
  %v454 = vrot.slane %v443, %v453
  %v455 = vlaneseq
  %v456 = vshrl.u32 %v455, 7
  %v457 = vsub.s32 0, %v456
  %v458 = vrot.slane %v444, %v457
  %v459 = vlaneseq
  %v460 = vshrl.u32 %v459, 7
  %v461 = vsub.s32 0, %v460
  %v462 = vrot.slane %v445, %v461
  %v463 = vlaneseq
  %v464 = vshrl.u32 %v463, 7
  %v465 = vsub.s32 0, %v464
  %v466 = vrot.slane %v446, %v465
  %v467 = vmul.f32 %v449, %v454
  %v468 = vmul.f32 %v449, %v458
  %v469 = vmul.f32 %v449, %v462
  %v470 = vmul.f32 %v449, %v466
  %v471 = vadd.f32 %v403, %v467
  %v472 = vadd.f32 %v404, %v468
  %v473 = vadd.f32 %v405, %v469
  %v474 = vadd.f32 %v406, %v470
  %475 = vrot.lane.b32.xlu0 %v35, 112
  %v476 = vpop.permute.xlu0 %475
  %477 = vrot.lane.b32.xlu0 %v39, 112
  %v478 = vpop.permute.xlu0 %477
  %479 = vrot.lane.b32.xlu0 %v43, 112
  %v480 = vpop.permute.xlu0 %479
  %481 = vrot.lane.b32.xlu0 %v47, 112
  %v482 = vpop.permute.xlu0 %481
  %vm483 = vcmp.lt.s32.totalorder %v61, 112
  %v484 = vsel %vm483, %v480, %v482
  %v485 = vsel %vm483, %v478, %v480
  %v486 = vsel %vm483, %v476, %v478
  %v487 = vsel %vm483, %v482, %v476
  %s488 = scalar_lea.vmem %s1, 7
  %v489 = vld [vmem:[%s488] ss:$8 sm:$0xf]
  %v491 = vlaneseq
  %v492 = vshrl.u32 %v491, 7
  %v493 = vsub.s32 0, %v492
  %v494 = vrot.slane %v489, %v493
  %v495 = vlaneseq
  %v496 = vshrl.u32 %v495, 7
  %v497 = vsub.s32 1, %v496
  %v498 = vrot.slane %v489, %v497
  %v499 = vlaneseq
  %v500 = vshrl.u32 %v499, 7
  %v501 = vsub.s32 2, %v500
  %v502 = vrot.slane %v489, %v501
  %v503 = vlaneseq
  %v504 = vshrl.u32 %v503, 7
  %v505 = vsub.s32 3, %v504
  %v506 = vrot.slane %v489, %v505
  %v511 = vmul.f32 %v486, %v494
  %v512 = vmul.f32 %v485, %v498
  %v513 = vmul.f32 %v484, %v502
  %v514 = vmul.f32 %v487, %v506
  %515 = vset.pattern.permute.xlu0 7
  %516 = vperm.xlu0 %515, %v93
  %v517 = vpop.permute.xlu0 %516
  %v519 = vlaneseq
  %v520 = vshrl.u32 %v519, 7
  %v521 = vsub.s32 0, %v520
  %v522 = vrot.slane %v511, %v521
  %v523 = vlaneseq
  %v524 = vshrl.u32 %v523, 7
  %v525 = vsub.s32 0, %v524
  %v526 = vrot.slane %v512, %v525
  %v527 = vlaneseq
  %v528 = vshrl.u32 %v527, 7
  %v529 = vsub.s32 0, %v528
  %v530 = vrot.slane %v513, %v529
  %v531 = vlaneseq
  %v532 = vshrl.u32 %v531, 7
  %v533 = vsub.s32 0, %v532
  %v534 = vrot.slane %v514, %v533
  %v535 = vmul.f32 %v517, %v522
  %v536 = vmul.f32 %v517, %v526
  %v537 = vmul.f32 %v517, %v530
  %v538 = vmul.f32 %v517, %v534
  %v539 = vadd.f32 %v471, %v535
  %v540 = vadd.f32 %v472, %v536
  %v541 = vadd.f32 %v473, %v537
  %v542 = vadd.f32 %v474, %v538
  %543 = vrot.lane.b32.xlu0 %v35, 111
  %v544 = vpop.permute.xlu0 %543
  %545 = vrot.lane.b32.xlu0 %v39, 111
  %v546 = vpop.permute.xlu0 %545
  %547 = vrot.lane.b32.xlu0 %v43, 111
  %v548 = vpop.permute.xlu0 %547
  %549 = vrot.lane.b32.xlu0 %v47, 111
  %v550 = vpop.permute.xlu0 %549
  %vm551 = vcmp.lt.s32.totalorder %v61, 111
  %v552 = vsel %vm551, %v548, %v550
  %v553 = vsel %vm551, %v546, %v548
  %v554 = vsel %vm551, %v544, %v546
  %v555 = vsel %vm551, %v550, %v544
  %s556 = scalar_lea.vmem %s1, 32
  %v557 = vld [vmem:[%s556] ss:$8 sm:$0xf]
  %v559 = vlaneseq
  %v560 = vshrl.u32 %v559, 7
  %v561 = vsub.s32 0, %v560
  %v562 = vrot.slane %v557, %v561
  %v563 = vlaneseq
  %v564 = vshrl.u32 %v563, 7
  %v565 = vsub.s32 1, %v564
  %v566 = vrot.slane %v557, %v565
  %v567 = vlaneseq
  %v568 = vshrl.u32 %v567, 7
  %v569 = vsub.s32 2, %v568
  %v570 = vrot.slane %v557, %v569
  %v571 = vlaneseq
  %v572 = vshrl.u32 %v571, 7
  %v573 = vsub.s32 3, %v572
  %v574 = vrot.slane %v557, %v573
  %v579 = vmul.f32 %v554, %v562
  %v580 = vmul.f32 %v553, %v566
  %v581 = vmul.f32 %v552, %v570
  %v582 = vmul.f32 %v555, %v574
  %583 = vset.pattern.permute.xlu0 8
  %584 = vperm.xlu0 %583, %v93
  %v585 = vpop.permute.xlu0 %584
  %v587 = vlaneseq
  %v588 = vshrl.u32 %v587, 7
  %v589 = vsub.s32 0, %v588
  %v590 = vrot.slane %v579, %v589
  %v591 = vlaneseq
  %v592 = vshrl.u32 %v591, 7
  %v593 = vsub.s32 0, %v592
  %v594 = vrot.slane %v580, %v593
  %v595 = vlaneseq
  %v596 = vshrl.u32 %v595, 7
  %v597 = vsub.s32 0, %v596
  %v598 = vrot.slane %v581, %v597
  %v599 = vlaneseq
  %v600 = vshrl.u32 %v599, 7
  %v601 = vsub.s32 0, %v600
  %v602 = vrot.slane %v582, %v601
  %v603 = vmul.f32 %v585, %v590
  %v604 = vmul.f32 %v585, %v594
  %v605 = vmul.f32 %v585, %v598
  %v606 = vmul.f32 %v585, %v602
  %v607 = vadd.f32 %v539, %v603
  %v608 = vadd.f32 %v540, %v604
  %v609 = vadd.f32 %v541, %v605
  %v610 = vadd.f32 %v542, %v606
  %v611 = vld [vmem:[%s3] sm:$0xff]
  %613 = vset.pattern.permute.xlu0 0
  %614 = vperm.xlu0 %613, %v611
  %v615 = vpop.permute.xlu0 %614
  %v617 = vadd.f32 %v607, %v615
  %v618 = vadd.f32 %v608, %v615
  %v619 = vadd.f32 %v609, %v615
  %v620 = vadd.f32 %v610, %v615
  %v621 = vmax.f32 %v617, 0.0
  %v622 = vmax.f32 %v618, 0.0
  %v623 = vmax.f32 %v619, 0.0
  %v624 = vmax.f32 %v620, 0.0
  %625 = vrot.lane.b32.xlu0 %v621, 17
  %v626 = vpop.permute.xlu0 %625
  %627 = vrot.lane.b32.xlu0 %v622, 17
  %v628 = vpop.permute.xlu0 %627
  %629 = vrot.lane.b32.xlu0 %v623, 17
  %v630 = vpop.permute.xlu0 %629
  %631 = vrot.lane.b32.xlu0 %v624, 17
  %v632 = vpop.permute.xlu0 %631
  %v633 = vsel %vm62, %v630, %v632
  %v634 = vsel %vm62, %v628, %v630
  %v635 = vsel %vm62, %v626, %v628
  %v636 = vsel %vm62, %v632, %v626
  %v637 = vmul.f32 %v636, %v72
  %v638 = vmul.f32 %v635, %v76
  %v639 = vmul.f32 %v634, %v80
  %v640 = vmul.f32 %v633, %v84
  %v641 = vpack.c.bf16 %v637, %v637
  %v642 = vpack.c.bf16 %v638, %v638
  %v643 = vpack.c.bf16 %v639, %v639
  %v644 = vpack.c.bf16 %v640, %v640
  %v649 = vunpack.c.l.b16 %v641
  %v650 = vunpack.c.l.b16 %v642
  %v651 = vunpack.c.l.b16 %v643
  %v652 = vunpack.c.l.b16 %v644
  %v653 = vpack.c.b16 %v650, %v649
  %v654 = vpack.c.b16 %v652, %v651
  %657 = vst [vmem:[#allocation2] sm:$0xff] %v653
  %658 = vst [vmem:[#allocation2 + $0x8] sm:$0xff] %v654
  %659 = vrot.lane.b32.xlu0 %v621, 16
  %v660 = vpop.permute.xlu0 %659
  %661 = vrot.lane.b32.xlu0 %v622, 16
  %v662 = vpop.permute.xlu0 %661
  %663 = vrot.lane.b32.xlu0 %v623, 16
  %v664 = vpop.permute.xlu0 %663
  %665 = vrot.lane.b32.xlu0 %v624, 16
  %v666 = vpop.permute.xlu0 %665
  %v667 = vsel %vm131, %v664, %v666
  %v668 = vsel %vm131, %v662, %v664
  %v669 = vsel %vm131, %v660, %v662
  %v670 = vsel %vm131, %v666, %v660
  %v671 = vld [vmem:[%s136] ss:$8 sm:$0xf]
  %v673 = vlaneseq
  %v674 = vshrl.u32 %v673, 7
  %v675 = vsub.s32 0, %v674
  %v676 = vrot.slane %v671, %v675
  %v677 = vlaneseq
  %v678 = vshrl.u32 %v677, 7
  %v679 = vsub.s32 1, %v678
  %v680 = vrot.slane %v671, %v679
  %v681 = vlaneseq
  %v682 = vshrl.u32 %v681, 7
  %v683 = vsub.s32 2, %v682
  %v684 = vrot.slane %v671, %v683
  %v685 = vlaneseq
  %v686 = vshrl.u32 %v685, 7
  %v687 = vsub.s32 3, %v686
  %v688 = vrot.slane %v671, %v687
  %v693 = vmul.f32 %v670, %v676
  %v694 = vmul.f32 %v669, %v680
  %v695 = vmul.f32 %v668, %v684
  %v696 = vmul.f32 %v667, %v688
  %v697 = vpack.c.bf16 %v693, %v693
  %v698 = vpack.c.bf16 %v694, %v694
  %v699 = vpack.c.bf16 %v695, %v695
  %v700 = vpack.c.bf16 %v696, %v696
  %v705 = vunpack.c.l.b16 %v697
  %v706 = vunpack.c.l.b16 %v698
  %v707 = vunpack.c.l.b16 %v699
  %v708 = vunpack.c.l.b16 %v700
  %v709 = vpack.c.b16 %v706, %v705
  %v710 = vpack.c.b16 %v708, %v707
  %713 = vst [vmem:[#allocation2 + $0x10] sm:$0xff] %v709
  %714 = vst [vmem:[#allocation2 + $0x18] sm:$0xff] %v710
  %715 = vrot.lane.b32.xlu0 %v621, 15
  %v716 = vpop.permute.xlu0 %715
  %717 = vrot.lane.b32.xlu0 %v622, 15
  %v718 = vpop.permute.xlu0 %717
  %719 = vrot.lane.b32.xlu0 %v623, 15
  %v720 = vpop.permute.xlu0 %719
  %721 = vrot.lane.b32.xlu0 %v624, 15
  %v722 = vpop.permute.xlu0 %721
  %v723 = vsel %vm199, %v720, %v722
  %v724 = vsel %vm199, %v718, %v720
  %v725 = vsel %vm199, %v716, %v718
  %v726 = vsel %vm199, %v722, %v716
  %v727 = vld [vmem:[%s204] ss:$8 sm:$0xf]
  %v729 = vlaneseq
  %v730 = vshrl.u32 %v729, 7
  %v731 = vsub.s32 0, %v730
  %v732 = vrot.slane %v727, %v731
  %v733 = vlaneseq
  %v734 = vshrl.u32 %v733, 7
  %v735 = vsub.s32 1, %v734
  %v736 = vrot.slane %v727, %v735
  %v737 = vlaneseq
  %v738 = vshrl.u32 %v737, 7
  %v739 = vsub.s32 2, %v738
  %v740 = vrot.slane %v727, %v739
  %v741 = vlaneseq
  %v742 = vshrl.u32 %v741, 7
  %v743 = vsub.s32 3, %v742
  %v744 = vrot.slane %v727, %v743
  %v749 = vmul.f32 %v726, %v732
  %v750 = vmul.f32 %v725, %v736
  %v751 = vmul.f32 %v724, %v740
  %v752 = vmul.f32 %v723, %v744
  %v753 = vpack.c.bf16 %v749, %v749
  %v754 = vpack.c.bf16 %v750, %v750
  %v755 = vpack.c.bf16 %v751, %v751
  %v756 = vpack.c.bf16 %v752, %v752
  %v761 = vunpack.c.l.b16 %v753
  %v762 = vunpack.c.l.b16 %v754
  %v763 = vunpack.c.l.b16 %v755
  %v764 = vunpack.c.l.b16 %v756
  %v765 = vpack.c.b16 %v762, %v761
  %v766 = vpack.c.b16 %v764, %v763
  %769 = vst [vmem:[#allocation2 + $0x20] sm:$0xff] %v765
  %770 = vst [vmem:[#allocation2 + $0x28] sm:$0xff] %v766
  %771 = vrot.lane.b32.xlu0 %v621, 1
  %v772 = vpop.permute.xlu0 %771
  %773 = vrot.lane.b32.xlu0 %v622, 1
  %v774 = vpop.permute.xlu0 %773
  %775 = vrot.lane.b32.xlu0 %v623, 1
  %v776 = vpop.permute.xlu0 %775
  %777 = vrot.lane.b32.xlu0 %v624, 1
  %v778 = vpop.permute.xlu0 %777
  %v779 = vsel %vm267, %v776, %v778
  %v780 = vsel %vm267, %v774, %v776
  %v781 = vsel %vm267, %v772, %v774
  %v782 = vsel %vm267, %v778, %v772
  %v783 = vld [vmem:[%s272] ss:$8 sm:$0xf]
  %v785 = vlaneseq
  %v786 = vshrl.u32 %v785, 7
  %v787 = vsub.s32 0, %v786
  %v788 = vrot.slane %v783, %v787
  %v789 = vlaneseq
  %v790 = vshrl.u32 %v789, 7
  %v791 = vsub.s32 1, %v790
  %v792 = vrot.slane %v783, %v791
  %v793 = vlaneseq
  %v794 = vshrl.u32 %v793, 7
  %v795 = vsub.s32 2, %v794
  %v796 = vrot.slane %v783, %v795
  %v797 = vlaneseq
  %v798 = vshrl.u32 %v797, 7
  %v799 = vsub.s32 3, %v798
  %v800 = vrot.slane %v783, %v799
  %v805 = vmul.f32 %v782, %v788
  %v806 = vmul.f32 %v781, %v792
  %v807 = vmul.f32 %v780, %v796
  %v808 = vmul.f32 %v779, %v800
  %v809 = vpack.c.bf16 %v805, %v805
  %v810 = vpack.c.bf16 %v806, %v806
  %v811 = vpack.c.bf16 %v807, %v807
  %v812 = vpack.c.bf16 %v808, %v808
  %v817 = vunpack.c.l.b16 %v809
  %v818 = vunpack.c.l.b16 %v810
  %v819 = vunpack.c.l.b16 %v811
  %v820 = vunpack.c.l.b16 %v812
  %v821 = vpack.c.b16 %v818, %v817
  %v822 = vpack.c.b16 %v820, %v819
  %825 = vst [vmem:[#allocation2 + $0x30] sm:$0xff] %v821
  %826 = vst [vmem:[#allocation2 + $0x38] sm:$0xff] %v822
  %v827 = vpack.c.bf16 %v621, %v621
  %v828 = vpack.c.bf16 %v622, %v622
  %v829 = vpack.c.bf16 %v623, %v623
  %v830 = vpack.c.bf16 %v624, %v624
  %v835 = vunpack.c.l.b16 %v827
  %v836 = vunpack.c.l.b16 %v828
  %v837 = vunpack.c.l.b16 %v829
  %v838 = vunpack.c.l.b16 %v830
  %v839 = vpack.c.b16 %v836, %v835
  %v840 = vpack.c.b16 %v838, %v837
  %843 = vst [vmem:[#allocation2 + $0x40] sm:$0xff] %v839
  %844 = vst [vmem:[#allocation2 + $0x48] sm:$0xff] %v840
  %845 = vrot.lane.b32.xlu0 %v621, 127
  %v846 = vpop.permute.xlu0 %845
  %847 = vrot.lane.b32.xlu0 %v622, 127
  %v848 = vpop.permute.xlu0 %847
  %849 = vrot.lane.b32.xlu0 %v623, 127
  %v850 = vpop.permute.xlu0 %849
  %851 = vrot.lane.b32.xlu0 %v624, 127
  %v852 = vpop.permute.xlu0 %851
  %v853 = vsel %vm347, %v850, %v852
  %v854 = vsel %vm347, %v848, %v850
  %v855 = vsel %vm347, %v846, %v848
  %v856 = vsel %vm347, %v852, %v846
  %v857 = vld [vmem:[%s352] ss:$8 sm:$0xf]
  %v859 = vlaneseq
  %v860 = vshrl.u32 %v859, 7
  %v861 = vsub.s32 0, %v860
  %v862 = vrot.slane %v857, %v861
  %v863 = vlaneseq
  %v864 = vshrl.u32 %v863, 7
  %v865 = vsub.s32 1, %v864
  %v866 = vrot.slane %v857, %v865
  %v867 = vlaneseq
  %v868 = vshrl.u32 %v867, 7
  %v869 = vsub.s32 2, %v868
  %v870 = vrot.slane %v857, %v869
  %v871 = vlaneseq
  %v872 = vshrl.u32 %v871, 7
  %v873 = vsub.s32 3, %v872
  %v874 = vrot.slane %v857, %v873
  %v879 = vmul.f32 %v855, %v862
  %v880 = vmul.f32 %v854, %v866
  %v881 = vmul.f32 %v853, %v870
  %v882 = vmul.f32 %v856, %v874
  %v883 = vpack.c.bf16 %v879, %v879
  %v884 = vpack.c.bf16 %v880, %v880
  %v885 = vpack.c.bf16 %v881, %v881
  %v886 = vpack.c.bf16 %v882, %v882
  %v891 = vunpack.c.l.b16 %v883
  %v892 = vunpack.c.l.b16 %v884
  %v893 = vunpack.c.l.b16 %v885
  %v894 = vunpack.c.l.b16 %v886
  %v895 = vpack.c.b16 %v892, %v891
  %v896 = vpack.c.b16 %v894, %v893
  %899 = vst [vmem:[#allocation2 + $0x50] sm:$0xff] %v895
  %900 = vst [vmem:[#allocation2 + $0x58] sm:$0xff] %v896
  %901 = vrot.lane.b32.xlu0 %v621, 113
  %v902 = vpop.permute.xlu0 %901
  %903 = vrot.lane.b32.xlu0 %v622, 113
  %v904 = vpop.permute.xlu0 %903
  %905 = vrot.lane.b32.xlu0 %v623, 113
  %v906 = vpop.permute.xlu0 %905
  %907 = vrot.lane.b32.xlu0 %v624, 113
  %v908 = vpop.permute.xlu0 %907
  %v909 = vsel %vm415, %v906, %v908
  %v910 = vsel %vm415, %v904, %v906
  %v911 = vsel %vm415, %v902, %v904
  %v912 = vsel %vm415, %v908, %v902
  %v913 = vld [vmem:[%s420] ss:$8 sm:$0xf]
  %v915 = vlaneseq
  %v916 = vshrl.u32 %v915, 7
  %v917 = vsub.s32 0, %v916
  %v918 = vrot.slane %v913, %v917
  %v919 = vlaneseq
  %v920 = vshrl.u32 %v919, 7
  %v921 = vsub.s32 1, %v920
  %v922 = vrot.slane %v913, %v921
  %v923 = vlaneseq
  %v924 = vshrl.u32 %v923, 7
  %v925 = vsub.s32 2, %v924
  %v926 = vrot.slane %v913, %v925
  %v927 = vlaneseq
  %v928 = vshrl.u32 %v927, 7
  %v929 = vsub.s32 3, %v928
  %v930 = vrot.slane %v913, %v929
  %v935 = vmul.f32 %v911, %v918
  %v936 = vmul.f32 %v910, %v922
  %v937 = vmul.f32 %v909, %v926
  %v938 = vmul.f32 %v912, %v930
  %v939 = vpack.c.bf16 %v935, %v935
  %v940 = vpack.c.bf16 %v936, %v936
  %v941 = vpack.c.bf16 %v937, %v937
  %v942 = vpack.c.bf16 %v938, %v938
  %v947 = vunpack.c.l.b16 %v939
  %v948 = vunpack.c.l.b16 %v940
  %v949 = vunpack.c.l.b16 %v941
  %v950 = vunpack.c.l.b16 %v942
  %v951 = vpack.c.b16 %v948, %v947
  %v952 = vpack.c.b16 %v950, %v949
  %955 = vst [vmem:[#allocation2 + $0x60] sm:$0xff] %v951
  %956 = vst [vmem:[#allocation2 + $0x68] sm:$0xff] %v952
  %957 = vrot.lane.b32.xlu0 %v621, 112
  %v958 = vpop.permute.xlu0 %957
  %959 = vrot.lane.b32.xlu0 %v622, 112
  %v960 = vpop.permute.xlu0 %959
  %961 = vrot.lane.b32.xlu0 %v623, 112
  %v962 = vpop.permute.xlu0 %961
  %963 = vrot.lane.b32.xlu0 %v624, 112
  %v964 = vpop.permute.xlu0 %963
  %v965 = vsel %vm483, %v962, %v964
  %v966 = vsel %vm483, %v960, %v962
  %v967 = vsel %vm483, %v958, %v960
  %v968 = vsel %vm483, %v964, %v958
  %v969 = vld [vmem:[%s488] ss:$8 sm:$0xf]
  %v971 = vlaneseq
  %v972 = vshrl.u32 %v971, 7
  %v973 = vsub.s32 0, %v972
  %v974 = vrot.slane %v969, %v973
  %v975 = vlaneseq
  %v976 = vshrl.u32 %v975, 7
  %v977 = vsub.s32 1, %v976
  %v978 = vrot.slane %v969, %v977
  %v979 = vlaneseq
  %v980 = vshrl.u32 %v979, 7
  %v981 = vsub.s32 2, %v980
  %v982 = vrot.slane %v969, %v981
  %v983 = vlaneseq
  %v984 = vshrl.u32 %v983, 7
  %v985 = vsub.s32 3, %v984
  %v986 = vrot.slane %v969, %v985
  %v991 = vmul.f32 %v967, %v974
  %v992 = vmul.f32 %v966, %v978
  %v993 = vmul.f32 %v965, %v982
  %v994 = vmul.f32 %v968, %v986
  %v995 = vpack.c.bf16 %v991, %v991
  %v996 = vpack.c.bf16 %v992, %v992
  %v997 = vpack.c.bf16 %v993, %v993
  %v998 = vpack.c.bf16 %v994, %v994
  %v1003 = vunpack.c.l.b16 %v995
  %v1004 = vunpack.c.l.b16 %v996
  %v1005 = vunpack.c.l.b16 %v997
  %v1006 = vunpack.c.l.b16 %v998
  %v1007 = vpack.c.b16 %v1004, %v1003
  %v1008 = vpack.c.b16 %v1006, %v1005
  %1011 = vst [vmem:[#allocation2 + $0x70] sm:$0xff] %v1007
  %1012 = vst [vmem:[#allocation2 + $0x78] sm:$0xff] %v1008
  %1013 = vrot.lane.b32.xlu0 %v621, 111
  %v1014 = vpop.permute.xlu0 %1013
  %1015 = vrot.lane.b32.xlu0 %v622, 111
  %v1016 = vpop.permute.xlu0 %1015
  %1017 = vrot.lane.b32.xlu0 %v623, 111
  %v1018 = vpop.permute.xlu0 %1017
  %1019 = vrot.lane.b32.xlu0 %v624, 111
  %v1020 = vpop.permute.xlu0 %1019
  %v1021 = vsel %vm551, %v1018, %v1020
  %v1022 = vsel %vm551, %v1016, %v1018
  %v1023 = vsel %vm551, %v1014, %v1016
  %v1024 = vsel %vm551, %v1020, %v1014
  %v1025 = vld [vmem:[%s556] ss:$8 sm:$0xf]
  %v1027 = vlaneseq
  %v1028 = vshrl.u32 %v1027, 7
  %v1029 = vsub.s32 0, %v1028
  %v1030 = vrot.slane %v1025, %v1029
  %v1031 = vlaneseq
  %v1032 = vshrl.u32 %v1031, 7
  %v1033 = vsub.s32 1, %v1032
  %v1034 = vrot.slane %v1025, %v1033
  %v1035 = vlaneseq
  %v1036 = vshrl.u32 %v1035, 7
  %v1037 = vsub.s32 2, %v1036
  %v1038 = vrot.slane %v1025, %v1037
  %v1039 = vlaneseq
  %v1040 = vshrl.u32 %v1039, 7
  %v1041 = vsub.s32 3, %v1040
  %v1042 = vrot.slane %v1025, %v1041
  %v1047 = vmul.f32 %v1023, %v1030
  %v1048 = vmul.f32 %v1022, %v1034
  %v1049 = vmul.f32 %v1021, %v1038
  %v1050 = vmul.f32 %v1024, %v1042
  %v1051 = vpack.c.bf16 %v1047, %v1047
  %v1052 = vpack.c.bf16 %v1048, %v1048
  %v1053 = vpack.c.bf16 %v1049, %v1049
  %v1054 = vpack.c.bf16 %v1050, %v1050
  %v1059 = vunpack.c.l.b16 %v1051
  %v1060 = vunpack.c.l.b16 %v1052
  %v1061 = vunpack.c.l.b16 %v1053
  %v1062 = vunpack.c.l.b16 %v1054
  %v1063 = vpack.c.b16 %v1060, %v1059
  %v1064 = vpack.c.b16 %v1062, %v1061
  %1067 = vst [vmem:[#allocation2 + $0x80] sm:$0xff] %v1063
  %1068 = vst [vmem:[#allocation2 + $0x88] sm:$0xff] %v1064
  %v1069 = vld [vmem:[%s4] sm:$0xf]
  %v1070 = vld [vmem:[#allocation2] sm:$0xff]
  %v1071 = vld [vmem:[#allocation2 + $0x8] sm:$0xff]
  %v1072 = vld [vmem:[#allocation2 + $0x10] sm:$0xff]
  %v1073 = vld [vmem:[#allocation2 + $0x18] sm:$0xff]
  %v1074 = vld [vmem:[#allocation2 + $0x20] sm:$0xff]
  %v1075 = vld [vmem:[#allocation2 + $0x28] sm:$0xff]
  %v1076 = vld [vmem:[#allocation2 + $0x30] sm:$0xff]
  %v1077 = vld [vmem:[#allocation2 + $0x38] sm:$0xff]
  %v1078 = vld [vmem:[#allocation2 + $0x40] sm:$0xff]
  %v1079 = vld [vmem:[#allocation2 + $0x48] sm:$0xff]
  %v1080 = vld [vmem:[#allocation2 + $0x50] sm:$0xff]
  %v1081 = vld [vmem:[#allocation2 + $0x58] sm:$0xff]
  %v1082 = vld [vmem:[#allocation2 + $0x60] sm:$0xff]
  %v1083 = vld [vmem:[#allocation2 + $0x68] sm:$0xff]
  %v1084 = vld [vmem:[#allocation2 + $0x70] sm:$0xff]
  %v1085 = vld [vmem:[#allocation2 + $0x78] sm:$0xff]
  %v1086 = vld [vmem:[#allocation2 + $0x80] sm:$0xff]
  %v1087 = vld [vmem:[#allocation2 + $0x88] sm:$0xff]
  %v1088 = vld [vmem:[%s5] sm:$0xff]
  %1090 = vset.pattern.permute.xlu0 0
  %1091 = vperm.xlu0 %1090, %v1088
  %v1092 = vpop.permute.xlu0 %1091
  %v1112 = vunpack.c.l.b16 %v1070
  %v1113 = vunpack.c.h.b16 %v1070
  %v1114 = vunpack.c.l.b16 %v1071
  %v1115 = vunpack.c.h.b16 %v1071
  %v1116 = vunpack.c.l.b16 %v1072
  %v1117 = vunpack.c.h.b16 %v1072
  %v1118 = vunpack.c.l.b16 %v1073
  %v1119 = vunpack.c.h.b16 %v1073
  %v1120 = vunpack.c.l.b16 %v1074
  %v1121 = vunpack.c.h.b16 %v1074
  %v1122 = vunpack.c.l.b16 %v1075
  %v1123 = vunpack.c.h.b16 %v1075
  %v1124 = vunpack.c.l.b16 %v1076
  %v1125 = vunpack.c.h.b16 %v1076
  %v1126 = vunpack.c.l.b16 %v1077
  %v1127 = vunpack.c.h.b16 %v1077
  %v1128 = vunpack.c.l.b16 %v1078
  %v1129 = vunpack.c.h.b16 %v1078
  %v1130 = vunpack.c.l.b16 %v1079
  %v1131 = vunpack.c.h.b16 %v1079
  %v1132 = vunpack.c.l.b16 %v1080
  %v1133 = vunpack.c.h.b16 %v1080
  %v1134 = vunpack.c.l.b16 %v1081
  %v1135 = vunpack.c.h.b16 %v1081
  %v1136 = vunpack.c.l.b16 %v1082
  %v1137 = vunpack.c.h.b16 %v1082
  %v1138 = vunpack.c.l.b16 %v1083
  %v1139 = vunpack.c.h.b16 %v1083
  %v1140 = vunpack.c.l.b16 %v1084
  %v1141 = vunpack.c.h.b16 %v1084
  %v1142 = vunpack.c.l.b16 %v1085
  %v1143 = vunpack.c.h.b16 %v1085
  %v1144 = vunpack.c.l.b16 %v1086
  %v1145 = vunpack.c.h.b16 %v1086
  %v1146 = vunpack.c.l.b16 %v1087
  %v1147 = vunpack.c.h.b16 %v1087
  %v1148 = vpack.c.b16 %v1116, %v1112
  %v1149 = vpack.c.b16 %v1117, %v1113
  %v1150 = vpack.c.b16 %v1118, %v1114
  %v1151 = vpack.c.b16 %v1119, %v1115
  %v1152 = vpack.c.b16 %v1124, %v1120
  %v1153 = vpack.c.b16 %v1125, %v1121
  %v1154 = vpack.c.b16 %v1126, %v1122
  %v1155 = vpack.c.b16 %v1127, %v1123
  %v1156 = vpack.c.b16 %v1132, %v1128
  %v1157 = vpack.c.b16 %v1133, %v1129
  %v1158 = vpack.c.b16 %v1134, %v1130
  %v1159 = vpack.c.b16 %v1135, %v1131
  %v1160 = vpack.c.b16 %v1140, %v1136
  %v1161 = vpack.c.b16 %v1141, %v1137
  %v1162 = vpack.c.b16 %v1142, %v1138
  %v1163 = vpack.c.b16 %v1143, %v1139
  %v1164 = vpack.c.b16 %v1144, %v1144
  %v1165 = vpack.c.b16 %v1145, %v1145
  %v1166 = vpack.c.b16 %v1146, %v1146
  %v1167 = vpack.c.b16 %v1147, %v1147
  %vm1184 = vcmask 588800
  %v1186 = vsel %vm1184, %v1069, 0
  %vm1188 = vcmask 1043456
  %v1190 = vsel %vm1188, %v1164, 0
  %v1193 = vsel %vm1188, %v1165, 0
  %v1196 = vsel %vm1188, %v1166, 0
  %v1199 = vsel %vm1188, %v1167, 0
  %1201 = vmatprep.subr.bf16.mxu0 %v1149
  %1202 = vmatpush1.bf16.msra.mxu0 %v1148
  %1203 = vmatprep.subr.bf16.mxu0 %v1153
  %1204 = vmatpush1.bf16.msra.mxu0 %v1152
  %1205 = vmatprep.subr.bf16.mxu0 %v1157
  %1206 = vmatpush1.bf16.msra.mxu0 %v1156
  %1207 = vmatprep.subr.bf16.mxu0 %v1161
  %1208 = vmatpush1.bf16.msra.mxu0 %v1160
  %1209 = vmatprep.subr.bf16.mxu0 %v1193
  %1210 = vmatpush1.bf16.msra.mxu0 %v1190
  %1211 = vmatprep.subr.bf16.mxu0 0
  %1212 = vmatpush1.bf16.msra.mxu0 0
  %1213 = vmatprep.subr.bf16.mxu0 0
  %1214 = vmatpush1.bf16.msra.mxu0 0
  %1215 = vmatprep.subr.bf16.mxu0 0
  %1216 = vmatpush1.bf16.msra.mxu0 0
  %1217 = vmatprep.subr.bf16.mxu0 0
  %1218 = vmatpush1.bf16.msra.mxu0 0
  %1219 = vmatprep.subr.bf16.mxu0 0
  %1220 = vmatpush1.bf16.msra.mxu0 0
  %1221 = vmatprep.subr.bf16.mxu0 0
  %1222 = vmatpush1.bf16.msra.mxu0 0
  %1223 = vmatprep.subr.bf16.mxu0 0
  %1224 = vmatpush1.bf16.msra.mxu0 0
  %1225 = vmatprep.subr.bf16.mxu0 0
  %1226 = vmatpush1.bf16.msra.mxu0 0
  %1227 = vmatprep.subr.bf16.mxu0 0
  %1228 = vmatpush1.bf16.msra.mxu0 0
  %1229 = vmatprep.subr.bf16.mxu0 0
  %1230 = vmatpush1.bf16.msra.mxu0 0
  %1231 = vmatprep.subr.bf16.mxu0 0
  %1232 = vmatpush1.bf16.msra.mxu0 0
  %1233 = vmatprep.mubr.bf16.mxu0 0
  %1234 = vmatmul.mubr.bf16.gmra.mrb[0].mxu0 %v1186
  %v1235 = vpop.f32.mrb[0].mxu0
  %v1236 = vadd.f32 %v1092, %v1235
  %v1237 = vpop.f32.mrb[0].mxu0
  %v1238 = vadd.f32 %v1092, %v1237
  %v1239 = vpop.f32.mrb[0].mxu0
  %v1240 = vpop.f32.mrb[0].mxu0
  %1241 = vdwg.mxu0
  %1242 = vmatprep.subr.bf16.mxu0 %v1151
  %1243 = vmatpush1.bf16.msra.mxu0 %v1150
  %1244 = vmatprep.subr.bf16.mxu0 %v1155
  %1245 = vmatpush1.bf16.msra.mxu0 %v1154
  %1246 = vmatprep.subr.bf16.mxu0 %v1159
  %1247 = vmatpush1.bf16.msra.mxu0 %v1158
  %1248 = vmatprep.subr.bf16.mxu0 %v1163
  %1249 = vmatpush1.bf16.msra.mxu0 %v1162
  %1250 = vmatprep.subr.bf16.mxu0 %v1199
  %1251 = vmatpush1.bf16.msra.mxu0 %v1196
  %1252 = vmatprep.subr.bf16.mxu0 0
  %1253 = vmatpush1.bf16.msra.mxu0 0
  %1254 = vmatprep.subr.bf16.mxu0 0
  %1255 = vmatpush1.bf16.msra.mxu0 0
  %1256 = vmatprep.subr.bf16.mxu0 0
  %1257 = vmatpush1.bf16.msra.mxu0 0
  %1258 = vmatprep.subr.bf16.mxu0 0
  %1259 = vmatpush1.bf16.msra.mxu0 0
  %1260 = vmatprep.subr.bf16.mxu0 0
  %1261 = vmatpush1.bf16.msra.mxu0 0
  %1262 = vmatprep.subr.bf16.mxu0 0
  %1263 = vmatpush1.bf16.msra.mxu0 0
  %1264 = vmatprep.subr.bf16.mxu0 0
  %1265 = vmatpush1.bf16.msra.mxu0 0
  %1266 = vmatprep.subr.bf16.mxu0 0
  %1267 = vmatpush1.bf16.msra.mxu0 0
  %1268 = vmatprep.subr.bf16.mxu0 0
  %1269 = vmatpush1.bf16.msra.mxu0 0
  %1270 = vmatprep.subr.bf16.mxu0 0
  %1271 = vmatpush1.bf16.msra.mxu0 0
  %1272 = vmatprep.subr.bf16.mxu0 0
  %1273 = vmatpush1.bf16.msra.mxu0 0
  %1274 = vmatprep.mubr.bf16.mxu0 0
  %1275 = vmatmul.mubr.bf16.gmra.mrb[0].mxu0 %v1186
  %v1276 = vpop.f32.mrb[0].mxu0
  %v1277 = vadd.f32 %v1092, %v1276
  %v1278 = vpop.f32.mrb[0].mxu0
  %v1279 = vadd.f32 %v1092, %v1278
  %v1280 = vpop.f32.mrb[0].mxu0
  %v1281 = vpop.f32.mrb[0].mxu0
  %1282 = vdwg.mxu0
  %v1283 = vmax.f32 %v1236, 0.0
  %v1284 = vmax.f32 %v1238, 0.0
  %v1285 = vmax.f32 %v1277, 0.0
  %v1286 = vmax.f32 %v1279, 0.0
  %1287 = vrot.lane.b32.xlu0 %v1283, 17
  %v1288 = vpop.permute.xlu0 %1287
  %1289 = vrot.lane.b32.xlu0 %v1284, 17
  %v1290 = vpop.permute.xlu0 %1289
  %1291 = vrot.lane.b32.xlu0 %v1285, 17
  %v1292 = vpop.permute.xlu0 %1291
  %1293 = vrot.lane.b32.xlu0 %v1286, 17
  %v1294 = vpop.permute.xlu0 %1293
  %v1295 = vsel %vm62, %v1292, %v1294
  %v1296 = vsel %vm62, %v1290, %v1292
  %v1297 = vsel %vm62, %v1288, %v1290
  %v1298 = vsel %vm62, %v1294, %v1288
  %v1299 = vld [vmem:[%s1] ss:$8 sm:$0xf]
  %v1301 = vlaneseq
  %v1302 = vshrl.u32 %v1301, 7
  %v1303 = vsub.s32 0, %v1302
  %v1304 = vrot.slane %v1299, %v1303
  %v1305 = vlaneseq
  %v1306 = vshrl.u32 %v1305, 7
  %v1307 = vsub.s32 1, %v1306
  %v1308 = vrot.slane %v1299, %v1307
  %v1309 = vlaneseq
  %v1310 = vshrl.u32 %v1309, 7
  %v1311 = vsub.s32 2, %v1310
  %v1312 = vrot.slane %v1299, %v1311
  %v1313 = vlaneseq
  %v1314 = vshrl.u32 %v1313, 7
  %v1315 = vsub.s32 3, %v1314
  %v1316 = vrot.slane %v1299, %v1315
  %v1321 = vmul.f32 %v1298, %v1304
  %v1322 = vmul.f32 %v1297, %v1308
  %v1323 = vmul.f32 %v1296, %v1312
  %v1324 = vmul.f32 %v1295, %v1316
  %v1325 = vpack.c.bf16 %v1321, %v1321
  %v1326 = vpack.c.bf16 %v1322, %v1322
  %v1327 = vpack.c.bf16 %v1323, %v1323
  %v1328 = vpack.c.bf16 %v1324, %v1324
  %v1333 = vunpack.c.l.b16 %v1325
  %v1334 = vunpack.c.l.b16 %v1326
  %v1335 = vunpack.c.l.b16 %v1327
  %v1336 = vunpack.c.l.b16 %v1328
  %v1337 = vpack.c.b16 %v1334, %v1333
  %v1338 = vpack.c.b16 %v1336, %v1335
  %1341 = vst [vmem:[#allocation2] sm:$0xff] %v1337
  %1342 = vst [vmem:[#allocation2 + $0x8] sm:$0xff] %v1338
  %1343 = vrot.lane.b32.xlu0 %v1283, 16
  %v1344 = vpop.permute.xlu0 %1343
  %1345 = vrot.lane.b32.xlu0 %v1284, 16
  %v1346 = vpop.permute.xlu0 %1345
  %1347 = vrot.lane.b32.xlu0 %v1285, 16
  %v1348 = vpop.permute.xlu0 %1347
  %1349 = vrot.lane.b32.xlu0 %v1286, 16
  %v1350 = vpop.permute.xlu0 %1349
  %v1351 = vsel %vm131, %v1348, %v1350
  %v1352 = vsel %vm131, %v1346, %v1348
  %v1353 = vsel %vm131, %v1344, %v1346
  %v1354 = vsel %vm131, %v1350, %v1344
  %v1355 = vld [vmem:[%s136] ss:$8 sm:$0xf]
  %v1357 = vlaneseq
  %v1358 = vshrl.u32 %v1357, 7
  %v1359 = vsub.s32 0, %v1358
  %v1360 = vrot.slane %v1355, %v1359
  %v1361 = vlaneseq
  %v1362 = vshrl.u32 %v1361, 7
  %v1363 = vsub.s32 1, %v1362
  %v1364 = vrot.slane %v1355, %v1363
  %v1365 = vlaneseq
  %v1366 = vshrl.u32 %v1365, 7
  %v1367 = vsub.s32 2, %v1366
  %v1368 = vrot.slane %v1355, %v1367
  %v1369 = vlaneseq
  %v1370 = vshrl.u32 %v1369, 7
  %v1371 = vsub.s32 3, %v1370
  %v1372 = vrot.slane %v1355, %v1371
  %v1377 = vmul.f32 %v1354, %v1360
  %v1378 = vmul.f32 %v1353, %v1364
  %v1379 = vmul.f32 %v1352, %v1368
  %v1380 = vmul.f32 %v1351, %v1372
  %v1381 = vpack.c.bf16 %v1377, %v1377
  %v1382 = vpack.c.bf16 %v1378, %v1378
  %v1383 = vpack.c.bf16 %v1379, %v1379
  %v1384 = vpack.c.bf16 %v1380, %v1380
  %v1389 = vunpack.c.l.b16 %v1381
  %v1390 = vunpack.c.l.b16 %v1382
  %v1391 = vunpack.c.l.b16 %v1383
  %v1392 = vunpack.c.l.b16 %v1384
  %v1393 = vpack.c.b16 %v1390, %v1389
  %v1394 = vpack.c.b16 %v1392, %v1391
  %1397 = vst [vmem:[#allocation2 + $0x10] sm:$0xff] %v1393
  %1398 = vst [vmem:[#allocation2 + $0x18] sm:$0xff] %v1394
  %1399 = vrot.lane.b32.xlu0 %v1283, 15
  %v1400 = vpop.permute.xlu0 %1399
  %1401 = vrot.lane.b32.xlu0 %v1284, 15
  %v1402 = vpop.permute.xlu0 %1401
  %1403 = vrot.lane.b32.xlu0 %v1285, 15
  %v1404 = vpop.permute.xlu0 %1403
  %1405 = vrot.lane.b32.xlu0 %v1286, 15
  %v1406 = vpop.permute.xlu0 %1405
  %v1407 = vsel %vm199, %v1404, %v1406
  %v1408 = vsel %vm199, %v1402, %v1404
  %v1409 = vsel %vm199, %v1400, %v1402
  %v1410 = vsel %vm199, %v1406, %v1400
  %v1411 = vld [vmem:[%s204] ss:$8 sm:$0xf]
  %v1413 = vlaneseq
  %v1414 = vshrl.u32 %v1413, 7
  %v1415 = vsub.s32 0, %v1414
  %v1416 = vrot.slane %v1411, %v1415
  %v1417 = vlaneseq
  %v1418 = vshrl.u32 %v1417, 7
  %v1419 = vsub.s32 1, %v1418
  %v1420 = vrot.slane %v1411, %v1419
  %v1421 = vlaneseq
  %v1422 = vshrl.u32 %v1421, 7
  %v1423 = vsub.s32 2, %v1422
  %v1424 = vrot.slane %v1411, %v1423
  %v1425 = vlaneseq
  %v1426 = vshrl.u32 %v1425, 7
  %v1427 = vsub.s32 3, %v1426
  %v1428 = vrot.slane %v1411, %v1427
  %v1433 = vmul.f32 %v1410, %v1416
  %v1434 = vmul.f32 %v1409, %v1420
  %v1435 = vmul.f32 %v1408, %v1424
  %v1436 = vmul.f32 %v1407, %v1428
  %v1437 = vpack.c.bf16 %v1433, %v1433
  %v1438 = vpack.c.bf16 %v1434, %v1434
  %v1439 = vpack.c.bf16 %v1435, %v1435
  %v1440 = vpack.c.bf16 %v1436, %v1436
  %v1445 = vunpack.c.l.b16 %v1437
  %v1446 = vunpack.c.l.b16 %v1438
  %v1447 = vunpack.c.l.b16 %v1439
  %v1448 = vunpack.c.l.b16 %v1440
  %v1449 = vpack.c.b16 %v1446, %v1445
  %v1450 = vpack.c.b16 %v1448, %v1447
  %1453 = vst [vmem:[#allocation2 + $0x20] sm:$0xff] %v1449
  %1454 = vst [vmem:[#allocation2 + $0x28] sm:$0xff] %v1450
  %1455 = vrot.lane.b32.xlu0 %v1283, 1
  %v1456 = vpop.permute.xlu0 %1455
  %1457 = vrot.lane.b32.xlu0 %v1284, 1
  %v1458 = vpop.permute.xlu0 %1457
  %1459 = vrot.lane.b32.xlu0 %v1285, 1
  %v1460 = vpop.permute.xlu0 %1459
  %1461 = vrot.lane.b32.xlu0 %v1286, 1
  %v1462 = vpop.permute.xlu0 %1461
  %v1463 = vsel %vm267, %v1460, %v1462
  %v1464 = vsel %vm267, %v1458, %v1460
  %v1465 = vsel %vm267, %v1456, %v1458
  %v1466 = vsel %vm267, %v1462, %v1456
  %v1467 = vld [vmem:[%s272] ss:$8 sm:$0xf]
  %v1469 = vlaneseq
  %v1470 = vshrl.u32 %v1469, 7
  %v1471 = vsub.s32 0, %v1470
  %v1472 = vrot.slane %v1467, %v1471
  %v1473 = vlaneseq
  %v1474 = vshrl.u32 %v1473, 7
  %v1475 = vsub.s32 1, %v1474
  %v1476 = vrot.slane %v1467, %v1475
  %v1477 = vlaneseq
  %v1478 = vshrl.u32 %v1477, 7
  %v1479 = vsub.s32 2, %v1478
  %v1480 = vrot.slane %v1467, %v1479
  %v1481 = vlaneseq
  %v1482 = vshrl.u32 %v1481, 7
  %v1483 = vsub.s32 3, %v1482
  %v1484 = vrot.slane %v1467, %v1483
  %v1489 = vmul.f32 %v1466, %v1472
  %v1490 = vmul.f32 %v1465, %v1476
  %v1491 = vmul.f32 %v1464, %v1480
  %v1492 = vmul.f32 %v1463, %v1484
  %v1493 = vpack.c.bf16 %v1489, %v1489
  %v1494 = vpack.c.bf16 %v1490, %v1490
  %v1495 = vpack.c.bf16 %v1491, %v1491
  %v1496 = vpack.c.bf16 %v1492, %v1492
  %v1501 = vunpack.c.l.b16 %v1493
  %v1502 = vunpack.c.l.b16 %v1494
  %v1503 = vunpack.c.l.b16 %v1495
  %v1504 = vunpack.c.l.b16 %v1496
  %v1505 = vpack.c.b16 %v1502, %v1501
  %v1506 = vpack.c.b16 %v1504, %v1503
  %1509 = vst [vmem:[#allocation2 + $0x30] sm:$0xff] %v1505
  %1510 = vst [vmem:[#allocation2 + $0x38] sm:$0xff] %v1506
  %v1511 = vpack.c.bf16 %v1283, %v1283
  %v1512 = vpack.c.bf16 %v1284, %v1284
  %v1513 = vpack.c.bf16 %v1285, %v1285
  %v1514 = vpack.c.bf16 %v1286, %v1286
  %v1519 = vunpack.c.l.b16 %v1511
  %v1520 = vunpack.c.l.b16 %v1512
  %v1521 = vunpack.c.l.b16 %v1513
  %v1522 = vunpack.c.l.b16 %v1514
  %v1523 = vpack.c.b16 %v1520, %v1519
  %v1524 = vpack.c.b16 %v1522, %v1521
  %1527 = vst [vmem:[#allocation2 + $0x40] sm:$0xff] %v1523
  %1528 = vst [vmem:[#allocation2 + $0x48] sm:$0xff] %v1524
  %1529 = vrot.lane.b32.xlu0 %v1283, 127
  %v1530 = vpop.permute.xlu0 %1529
  %1531 = vrot.lane.b32.xlu0 %v1284, 127
  %v1532 = vpop.permute.xlu0 %1531
  %1533 = vrot.lane.b32.xlu0 %v1285, 127
  %v1534 = vpop.permute.xlu0 %1533
  %1535 = vrot.lane.b32.xlu0 %v1286, 127
  %v1536 = vpop.permute.xlu0 %1535
  %v1537 = vsel %vm347, %v1534, %v1536
  %v1538 = vsel %vm347, %v1532, %v1534
  %v1539 = vsel %vm347, %v1530, %v1532
  %v1540 = vsel %vm347, %v1536, %v1530
  %v1541 = vld [vmem:[%s352] ss:$8 sm:$0xf]
  %v1543 = vlaneseq
  %v1544 = vshrl.u32 %v1543, 7
  %v1545 = vsub.s32 0, %v1544
  %v1546 = vrot.slane %v1541, %v1545
  %v1547 = vlaneseq
  %v1548 = vshrl.u32 %v1547, 7
  %v1549 = vsub.s32 1, %v1548
  %v1550 = vrot.slane %v1541, %v1549
  %v1551 = vlaneseq
  %v1552 = vshrl.u32 %v1551, 7
  %v1553 = vsub.s32 2, %v1552
  %v1554 = vrot.slane %v1541, %v1553
  %v1555 = vlaneseq
  %v1556 = vshrl.u32 %v1555, 7
  %v1557 = vsub.s32 3, %v1556
  %v1558 = vrot.slane %v1541, %v1557
  %v1563 = vmul.f32 %v1539, %v1546
  %v1564 = vmul.f32 %v1538, %v1550
  %v1565 = vmul.f32 %v1537, %v1554
  %v1566 = vmul.f32 %v1540, %v1558
  %v1567 = vpack.c.bf16 %v1563, %v1563
  %v1568 = vpack.c.bf16 %v1564, %v1564
  %v1569 = vpack.c.bf16 %v1565, %v1565
  %v1570 = vpack.c.bf16 %v1566, %v1566
  %v1575 = vunpack.c.l.b16 %v1567
  %v1576 = vunpack.c.l.b16 %v1568
  %v1577 = vunpack.c.l.b16 %v1569
  %v1578 = vunpack.c.l.b16 %v1570
  %v1579 = vpack.c.b16 %v1576, %v1575
  %v1580 = vpack.c.b16 %v1578, %v1577
  %1583 = vst [vmem:[#allocation2 + $0x50] sm:$0xff] %v1579
  %1584 = vst [vmem:[#allocation2 + $0x58] sm:$0xff] %v1580
  %1585 = vrot.lane.b32.xlu0 %v1283, 113
  %v1586 = vpop.permute.xlu0 %1585
  %1587 = vrot.lane.b32.xlu0 %v1284, 113
  %v1588 = vpop.permute.xlu0 %1587
  %1589 = vrot.lane.b32.xlu0 %v1285, 113
  %v1590 = vpop.permute.xlu0 %1589
  %1591 = vrot.lane.b32.xlu0 %v1286, 113
  %v1592 = vpop.permute.xlu0 %1591
  %v1593 = vsel %vm415, %v1590, %v1592
  %v1594 = vsel %vm415, %v1588, %v1590
  %v1595 = vsel %vm415, %v1586, %v1588
  %v1596 = vsel %vm415, %v1592, %v1586
  %v1597 = vld [vmem:[%s420] ss:$8 sm:$0xf]
  %v1599 = vlaneseq
  %v1600 = vshrl.u32 %v1599, 7
  %v1601 = vsub.s32 0, %v1600
  %v1602 = vrot.slane %v1597, %v1601
  %v1603 = vlaneseq
  %v1604 = vshrl.u32 %v1603, 7
  %v1605 = vsub.s32 1, %v1604
  %v1606 = vrot.slane %v1597, %v1605
  %v1607 = vlaneseq
  %v1608 = vshrl.u32 %v1607, 7
  %v1609 = vsub.s32 2, %v1608
  %v1610 = vrot.slane %v1597, %v1609
  %v1611 = vlaneseq
  %v1612 = vshrl.u32 %v1611, 7
  %v1613 = vsub.s32 3, %v1612
  %v1614 = vrot.slane %v1597, %v1613
  %v1619 = vmul.f32 %v1595, %v1602
  %v1620 = vmul.f32 %v1594, %v1606
  %v1621 = vmul.f32 %v1593, %v1610
  %v1622 = vmul.f32 %v1596, %v1614
  %v1623 = vpack.c.bf16 %v1619, %v1619
  %v1624 = vpack.c.bf16 %v1620, %v1620
  %v1625 = vpack.c.bf16 %v1621, %v1621
  %v1626 = vpack.c.bf16 %v1622, %v1622
  %v1631 = vunpack.c.l.b16 %v1623
  %v1632 = vunpack.c.l.b16 %v1624
  %v1633 = vunpack.c.l.b16 %v1625
  %v1634 = vunpack.c.l.b16 %v1626
  %v1635 = vpack.c.b16 %v1632, %v1631
  %v1636 = vpack.c.b16 %v1634, %v1633
  %1639 = vst [vmem:[#allocation2 + $0x60] sm:$0xff] %v1635
  %1640 = vst [vmem:[#allocation2 + $0x68] sm:$0xff] %v1636
  %1641 = vrot.lane.b32.xlu0 %v1283, 112
  %v1642 = vpop.permute.xlu0 %1641
  %1643 = vrot.lane.b32.xlu0 %v1284, 112
  %v1644 = vpop.permute.xlu0 %1643
  %1645 = vrot.lane.b32.xlu0 %v1285, 112
  %v1646 = vpop.permute.xlu0 %1645
  %1647 = vrot.lane.b32.xlu0 %v1286, 112
  %v1648 = vpop.permute.xlu0 %1647
  %v1649 = vsel %vm483, %v1646, %v1648
  %v1650 = vsel %vm483, %v1644, %v1646
  %v1651 = vsel %vm483, %v1642, %v1644
  %v1652 = vsel %vm483, %v1648, %v1642
  %v1653 = vld [vmem:[%s488] ss:$8 sm:$0xf]
  %v1655 = vlaneseq
  %v1656 = vshrl.u32 %v1655, 7
  %v1657 = vsub.s32 0, %v1656
  %v1658 = vrot.slane %v1653, %v1657
  %v1659 = vlaneseq
  %v1660 = vshrl.u32 %v1659, 7
  %v1661 = vsub.s32 1, %v1660
  %v1662 = vrot.slane %v1653, %v1661
  %v1663 = vlaneseq
  %v1664 = vshrl.u32 %v1663, 7
  %v1665 = vsub.s32 2, %v1664
  %v1666 = vrot.slane %v1653, %v1665
  %v1667 = vlaneseq
  %v1668 = vshrl.u32 %v1667, 7
  %v1669 = vsub.s32 3, %v1668
  %v1670 = vrot.slane %v1653, %v1669
  %v1675 = vmul.f32 %v1651, %v1658
  %v1676 = vmul.f32 %v1650, %v1662
  %v1677 = vmul.f32 %v1649, %v1666
  %v1678 = vmul.f32 %v1652, %v1670
  %v1679 = vpack.c.bf16 %v1675, %v1675
  %v1680 = vpack.c.bf16 %v1676, %v1676
  %v1681 = vpack.c.bf16 %v1677, %v1677
  %v1682 = vpack.c.bf16 %v1678, %v1678
  %v1687 = vunpack.c.l.b16 %v1679
  %v1688 = vunpack.c.l.b16 %v1680
  %v1689 = vunpack.c.l.b16 %v1681
  %v1690 = vunpack.c.l.b16 %v1682
  %v1691 = vpack.c.b16 %v1688, %v1687
  %v1692 = vpack.c.b16 %v1690, %v1689
  %1695 = vst [vmem:[#allocation2 + $0x70] sm:$0xff] %v1691
  %1696 = vst [vmem:[#allocation2 + $0x78] sm:$0xff] %v1692
  %1697 = vrot.lane.b32.xlu0 %v1283, 111
  %v1698 = vpop.permute.xlu0 %1697
  %1699 = vrot.lane.b32.xlu0 %v1284, 111
  %v1700 = vpop.permute.xlu0 %1699
  %1701 = vrot.lane.b32.xlu0 %v1285, 111
  %v1702 = vpop.permute.xlu0 %1701
  %1703 = vrot.lane.b32.xlu0 %v1286, 111
  %v1704 = vpop.permute.xlu0 %1703
  %v1705 = vsel %vm551, %v1702, %v1704
  %v1706 = vsel %vm551, %v1700, %v1702
  %v1707 = vsel %vm551, %v1698, %v1700
  %v1708 = vsel %vm551, %v1704, %v1698
  %v1709 = vld [vmem:[%s556] ss:$8 sm:$0xf]
  %v1711 = vlaneseq
  %v1712 = vshrl.u32 %v1711, 7
  %v1713 = vsub.s32 0, %v1712
  %v1714 = vrot.slane %v1709, %v1713
  %v1715 = vlaneseq
  %v1716 = vshrl.u32 %v1715, 7
  %v1717 = vsub.s32 1, %v1716
  %v1718 = vrot.slane %v1709, %v1717
  %v1719 = vlaneseq
  %v1720 = vshrl.u32 %v1719, 7
  %v1721 = vsub.s32 2, %v1720
  %v1722 = vrot.slane %v1709, %v1721
  %v1723 = vlaneseq
  %v1724 = vshrl.u32 %v1723, 7
  %v1725 = vsub.s32 3, %v1724
  %v1726 = vrot.slane %v1709, %v1725
  %v1731 = vmul.f32 %v1707, %v1714
  %v1732 = vmul.f32 %v1706, %v1718
  %v1733 = vmul.f32 %v1705, %v1722
  %v1734 = vmul.f32 %v1708, %v1726
  %v1735 = vpack.c.bf16 %v1731, %v1731
  %v1736 = vpack.c.bf16 %v1732, %v1732
  %v1737 = vpack.c.bf16 %v1733, %v1733
  %v1738 = vpack.c.bf16 %v1734, %v1734
  %v1743 = vunpack.c.l.b16 %v1735
  %v1744 = vunpack.c.l.b16 %v1736
  %v1745 = vunpack.c.l.b16 %v1737
  %v1746 = vunpack.c.l.b16 %v1738
  %v1747 = vpack.c.b16 %v1744, %v1743
  %v1748 = vpack.c.b16 %v1746, %v1745
  %1751 = vst [vmem:[#allocation2 + $0x80] sm:$0xff] %v1747
  %1752 = vst [vmem:[#allocation2 + $0x88] sm:$0xff] %v1748
  %v1753 = vld [vmem:[%s6] sm:$0x3]
  %v1754 = vld [vmem:[#allocation2] sm:$0xff]
  %v1755 = vld [vmem:[#allocation2 + $0x8] sm:$0xff]
  %v1756 = vld [vmem:[#allocation2 + $0x10] sm:$0xff]
  %v1757 = vld [vmem:[#allocation2 + $0x18] sm:$0xff]
  %v1758 = vld [vmem:[#allocation2 + $0x20] sm:$0xff]
  %v1759 = vld [vmem:[#allocation2 + $0x28] sm:$0xff]
  %v1760 = vld [vmem:[#allocation2 + $0x30] sm:$0xff]
  %v1761 = vld [vmem:[#allocation2 + $0x38] sm:$0xff]
  %v1762 = vld [vmem:[#allocation2 + $0x40] sm:$0xff]
  %v1763 = vld [vmem:[#allocation2 + $0x48] sm:$0xff]
  %v1764 = vld [vmem:[#allocation2 + $0x50] sm:$0xff]
  %v1765 = vld [vmem:[#allocation2 + $0x58] sm:$0xff]
  %v1766 = vld [vmem:[#allocation2 + $0x60] sm:$0xff]
  %v1767 = vld [vmem:[#allocation2 + $0x68] sm:$0xff]
  %v1768 = vld [vmem:[#allocation2 + $0x70] sm:$0xff]
  %v1769 = vld [vmem:[#allocation2 + $0x78] sm:$0xff]
  %v1770 = vld [vmem:[#allocation2 + $0x80] sm:$0xff]
  %v1771 = vld [vmem:[#allocation2 + $0x88] sm:$0xff]
  %v1772 = vld [vmem:[%s7] sm:$0x7]
  %1774 = vset.pattern.permute.xlu0 0
  %1775 = vperm.xlu0 %1774, %v1772
  %v1776 = vpop.permute.xlu0 %1775
  %v1796 = vunpack.c.l.b16 %v1754
  %v1797 = vunpack.c.h.b16 %v1754
  %v1798 = vunpack.c.l.b16 %v1755
  %v1799 = vunpack.c.h.b16 %v1755
  %v1800 = vunpack.c.l.b16 %v1756
  %v1801 = vunpack.c.h.b16 %v1756
  %v1802 = vunpack.c.l.b16 %v1757
  %v1803 = vunpack.c.h.b16 %v1757
  %v1804 = vunpack.c.l.b16 %v1758
  %v1805 = vunpack.c.h.b16 %v1758
  %v1806 = vunpack.c.l.b16 %v1759
  %v1807 = vunpack.c.h.b16 %v1759
  %v1808 = vunpack.c.l.b16 %v1760
  %v1809 = vunpack.c.h.b16 %v1760
  %v1810 = vunpack.c.l.b16 %v1761
  %v1811 = vunpack.c.h.b16 %v1761
  %v1812 = vunpack.c.l.b16 %v1762
  %v1813 = vunpack.c.h.b16 %v1762
  %v1814 = vunpack.c.l.b16 %v1763
  %v1815 = vunpack.c.h.b16 %v1763
  %v1816 = vunpack.c.l.b16 %v1764
  %v1817 = vunpack.c.h.b16 %v1764
  %v1818 = vunpack.c.l.b16 %v1765
  %v1819 = vunpack.c.h.b16 %v1765
  %v1820 = vunpack.c.l.b16 %v1766
  %v1821 = vunpack.c.h.b16 %v1766
  %v1822 = vunpack.c.l.b16 %v1767
  %v1823 = vunpack.c.h.b16 %v1767
  %v1824 = vunpack.c.l.b16 %v1768
  %v1825 = vunpack.c.h.b16 %v1768
  %v1826 = vunpack.c.l.b16 %v1769
  %v1827 = vunpack.c.h.b16 %v1769
  %v1828 = vunpack.c.l.b16 %v1770
  %v1829 = vunpack.c.h.b16 %v1770
  %v1830 = vunpack.c.l.b16 %v1771
  %v1831 = vunpack.c.h.b16 %v1771
  %v1832 = vpack.c.b16 %v1800, %v1796
  %v1833 = vpack.c.b16 %v1801, %v1797
  %v1834 = vpack.c.b16 %v1802, %v1798
  %v1835 = vpack.c.b16 %v1803, %v1799
  %v1836 = vpack.c.b16 %v1808, %v1804
  %v1837 = vpack.c.b16 %v1809, %v1805
  %v1838 = vpack.c.b16 %v1810, %v1806
  %v1839 = vpack.c.b16 %v1811, %v1807
  %v1840 = vpack.c.b16 %v1816, %v1812
  %v1841 = vpack.c.b16 %v1817, %v1813
  %v1842 = vpack.c.b16 %v1818, %v1814
  %v1843 = vpack.c.b16 %v1819, %v1815
  %v1844 = vpack.c.b16 %v1824, %v1820
  %v1845 = vpack.c.b16 %v1825, %v1821
  %v1846 = vpack.c.b16 %v1826, %v1822
  %v1847 = vpack.c.b16 %v1827, %v1823
  %v1848 = vpack.c.b16 %v1828, %v1828
  %v1849 = vpack.c.b16 %v1829, %v1829
  %v1850 = vpack.c.b16 %v1830, %v1830
  %v1851 = vpack.c.b16 %v1831, %v1831
  %v1869 = vsel %vm1184, %v1753, 0
  %v1872 = vsel %vm1188, %v1848, 0
  %v1875 = vsel %vm1188, %v1849, 0
  %v1878 = vsel %vm1188, %v1850, 0
  %v1881 = vsel %vm1188, %v1851, 0
  %1883 = vmatprep.subr.bf16.mxu0 %v1833
  %1884 = vmatpush1.bf16.msra.mxu0 %v1832
  %1885 = vmatprep.subr.bf16.mxu0 %v1837
  %1886 = vmatpush1.bf16.msra.mxu0 %v1836
  %1887 = vmatprep.subr.bf16.mxu0 %v1841
  %1888 = vmatpush1.bf16.msra.mxu0 %v1840
  %1889 = vmatprep.subr.bf16.mxu0 %v1845
  %1890 = vmatpush1.bf16.msra.mxu0 %v1844
  %1891 = vmatprep.subr.bf16.mxu0 %v1875
  %1892 = vmatpush1.bf16.msra.mxu0 %v1872
  %1893 = vmatprep.subr.bf16.mxu0 0
  %1894 = vmatpush1.bf16.msra.mxu0 0
  %1895 = vmatprep.subr.bf16.mxu0 0
  %1896 = vmatpush1.bf16.msra.mxu0 0
  %1897 = vmatprep.subr.bf16.mxu0 0
  %1898 = vmatpush1.bf16.msra.mxu0 0
  %1899 = vmatprep.subr.bf16.mxu0 0
  %1900 = vmatpush1.bf16.msra.mxu0 0
  %1901 = vmatprep.subr.bf16.mxu0 0
  %1902 = vmatpush1.bf16.msra.mxu0 0
  %1903 = vmatprep.subr.bf16.mxu0 0
  %1904 = vmatpush1.bf16.msra.mxu0 0
  %1905 = vmatprep.subr.bf16.mxu0 0
  %1906 = vmatpush1.bf16.msra.mxu0 0
  %1907 = vmatprep.subr.bf16.mxu0 0
  %1908 = vmatpush1.bf16.msra.mxu0 0
  %1909 = vmatprep.subr.bf16.mxu0 0
  %1910 = vmatpush1.bf16.msra.mxu0 0
  %1911 = vmatprep.subr.bf16.mxu0 0
  %1912 = vmatpush1.bf16.msra.mxu0 0
  %1913 = vmatprep.subr.bf16.mxu0 0
  %1914 = vmatpush1.bf16.msra.mxu0 0
  %1915 = vmatprep.mubr.bf16.mxu0 0
  %1916 = vmatmul.mubr.bf16.gmra.mrb[0].mxu0 %v1869
  %v1917 = vpop.f32.mrb[0].mxu0
  %v1918 = vadd.f32 %v1776, %v1917
  %v1919 = vpop.f32.mrb[0].mxu0
  %v1920 = vadd.f32 %v1776, %v1919
  %v1921 = vpop.f32.mrb[0].mxu0
  %v1922 = vpop.f32.mrb[0].mxu0
  %1923 = vdwg.mxu0
  %1924 = vmatprep.subr.bf16.mxu0 %v1835
  %1925 = vmatpush1.bf16.msra.mxu0 %v1834
  %1926 = vmatprep.subr.bf16.mxu0 %v1839
  %1927 = vmatpush1.bf16.msra.mxu0 %v1838
  %1928 = vmatprep.subr.bf16.mxu0 %v1843
  %1929 = vmatpush1.bf16.msra.mxu0 %v1842
  %1930 = vmatprep.subr.bf16.mxu0 %v1847
  %1931 = vmatpush1.bf16.msra.mxu0 %v1846
  %1932 = vmatprep.subr.bf16.mxu0 %v1881
  %1933 = vmatpush1.bf16.msra.mxu0 %v1878
  %1934 = vmatprep.subr.bf16.mxu0 0
  %1935 = vmatpush1.bf16.msra.mxu0 0
  %1936 = vmatprep.subr.bf16.mxu0 0
  %1937 = vmatpush1.bf16.msra.mxu0 0
  %1938 = vmatprep.subr.bf16.mxu0 0
  %1939 = vmatpush1.bf16.msra.mxu0 0
  %1940 = vmatprep.subr.bf16.mxu0 0
  %1941 = vmatpush1.bf16.msra.mxu0 0
  %1942 = vmatprep.subr.bf16.mxu0 0
  %1943 = vmatpush1.bf16.msra.mxu0 0
  %1944 = vmatprep.subr.bf16.mxu0 0
  %1945 = vmatpush1.bf16.msra.mxu0 0
  %1946 = vmatprep.subr.bf16.mxu0 0
  %1947 = vmatpush1.bf16.msra.mxu0 0
  %1948 = vmatprep.subr.bf16.mxu0 0
  %1949 = vmatpush1.bf16.msra.mxu0 0
  %1950 = vmatprep.subr.bf16.mxu0 0
  %1951 = vmatpush1.bf16.msra.mxu0 0
  %1952 = vmatprep.subr.bf16.mxu0 0
  %1953 = vmatpush1.bf16.msra.mxu0 0
  %1954 = vmatprep.subr.bf16.mxu0 0
  %1955 = vmatpush1.bf16.msra.mxu0 0
  %1956 = vmatprep.mubr.bf16.mxu0 0
  %1957 = vmatmul.mubr.bf16.gmra.mrb[0].mxu0 %v1869
  %v1958 = vpop.f32.mrb[0].mxu0
  %v1959 = vadd.f32 %v1776, %v1958
  %v1960 = vpop.f32.mrb[0].mxu0
  %v1961 = vadd.f32 %v1776, %v1960
  %v1962 = vpop.f32.mrb[0].mxu0
  %v1963 = vpop.f32.mrb[0].mxu0
  %1964 = vdwg.mxu0
  %v1965 = vtanh.pop %v1918
  %v1966 = vtanh.pop %v1920
  %v1967 = vtanh.pop %v1959
  %v1968 = vtanh.pop %v1961
  %v1973 = vcombine.low %v1965, %v1966
  %v1974 = vcombine.low %v1967, %v1968
  %1977 = vst [vmem:[%s8] sm:$0x77] %v1973
  %1978 = vst [vmem:[%s8 + $0x8] sm:$0x77] %v1974
  // Predicated region
  $region34: #{decode_net_pro_forward.1} parent=0 // pred_check
    _
  $region35: #{decode_net_pro_forward.1} parent=0 // pred_check_branch
    %1980 = sbr.rel (0) target = $region37
  $region36: #{decode_net_pro_forward.1} parent=0 // pred_region
    _
  $region37: #{decode_net_pro_forward.1} parent=0 // pred_fallthru
    _
  // Predicated region
  $region38: #{decode_net_pro_forward.1} parent=0 // pred_check
    _
  $region39: #{decode_net_pro_forward.1} parent=0 // pred_check_branch
    %1982 = sbr.rel (0) target = $region41
  $region40: #{decode_net_pro_forward.1} parent=0 // pred_region
    _
  $region41: #{decode_net_pro_forward.1} parent=0 // pred_fallthru
    _

</llo_original>
